<compile_context>
chip_gen: v7x
topology: tpu7x:2x2x1
jax: 0.10.0
libtpu: 0.0.40
codegen_flags: <defaults>
</compile_context>

<pallas_src>
import functools

import jax
import jax.numpy as jnp
from jax.experimental import pallas as pl
from jax.experimental.pallas import tpu as pltpu

LOC_PAD = 8          # loc head output padded to 8 lanes (column 0 is the logit)
QUAD_DIM = 8
ROW_TILE = 256       # max rows per grid step (multiple of 32)
LN_EPS = 1e-5


def _round_up(x, m):
    return (x + m - 1) // m * m


def _pick_tile(rows):
    rows = max(rows, 32)
    return ROW_TILE if rows > ROW_TILE else _round_up(rows, 32)


def _compiler_params(block_bytes):
    # explicit scoped-VMEM budget derived from the tile (double-buffered, +margin)
    vmem = int(min(32 << 20, max(16 << 20, 4 * block_bytes)))
    return pltpu.CompilerParams(dimension_semantics=("parallel",),
                                vmem_limit_bytes=vmem)


# -----------------------------------------------------------------------------
# Kernel A: all laterals + global-context broadcast + loc head, one launch
# -----------------------------------------------------------------------------
def _lateral_loc_kernel(xa_ref, wa_ref, sel_ref, gbar_ref,
                        whl_ref, bhl_ref, lgl_ref, lbl_ref, wol_ref, bol_ref,
                        feat_ref, loc_ref, *, num_layers, num_channels):
    # All lateral 1x1 convs (+ folded BN bias via indicator columns) + SiLU.
    ya = jnp.dot(xa_ref[...], wa_ref[...], preferred_element_type=jnp.float32)
    ya = ya * jax.nn.sigmoid(ya)                            # (Tm, C) f32

    # Per-batch global-context mean added via tiny (Tm, B) one-hot selector.
    feats = ya + jnp.dot(sel_ref[...], gbar_ref[...],
                         preferred_element_type=jnp.float32)
    feat_ref[...] = feats.astype(feat_ref.dtype)

    # loc head: num_layers x (Linear -> LayerNorm -> SiLU) -> Linear
    inv_c = 1.0 / num_channels
    h = feats
    for l in range(num_layers):
        z = jnp.dot(h.astype(jnp.bfloat16), whl_ref[l],
                    preferred_element_type=jnp.float32) + bhl_ref[l]
        s1 = jnp.sum(z, axis=-1, keepdims=True)             # single-pass LN stats
        s2 = jnp.sum(z * z, axis=-1, keepdims=True)
        mu = s1 * inv_c
        var = s2 * inv_c - mu * mu
        z = (z - mu) * jax.lax.rsqrt(var + LN_EPS)
        z = z * lgl_ref[l] + lbl_ref[l]
        h = z * jax.nn.sigmoid(z)                           # SiLU
    loc_ref[...] = (jnp.dot(h.astype(jnp.bfloat16), wol_ref[...],
                            preferred_element_type=jnp.float32) + bol_ref[...])


def fused_lateral_loc(xa, wa, sel, gbar, loc_params, *, num_layers, num_channels):
    R, ka = xa.shape
    B = sel.shape[1]
    C = num_channels
    whl, bhl, lgl, lbl, wol, bol = loc_params
    tile = R if R <= ROW_TILE else ROW_TILE                 # R is a multiple of tile
    grid = R // tile
    block_bytes = (tile * ka * 2 + tile * B * 2 + tile * C * 2 + tile * LOC_PAD * 4
                   + ka * C * 2 + B * C * 2
                   + num_layers * C * C * 2 + 3 * num_layers * C * 4
                   + C * LOC_PAD * 2 + LOC_PAD * 4)
    kern = functools.partial(_lateral_loc_kernel,
                             num_layers=num_layers, num_channels=C)
    return pl.pallas_call(
        kern,
        out_shape=(jax.ShapeDtypeStruct((R, C), jnp.bfloat16),
                   jax.ShapeDtypeStruct((R, LOC_PAD), jnp.float32)),
        grid=(grid,),
        in_specs=[
            pl.BlockSpec((tile, ka), lambda i: (i, 0)),
            pl.BlockSpec((ka, C), lambda i: (0, 0)),
            pl.BlockSpec((tile, B), lambda i: (i, 0)),
            pl.BlockSpec((B, C), lambda i: (0, 0)),
            pl.BlockSpec((num_layers, C, C), lambda i: (0, 0, 0)),
            pl.BlockSpec((num_layers, 1, C), lambda i: (0, 0, 0)),
            pl.BlockSpec((num_layers, 1, C), lambda i: (0, 0, 0)),
            pl.BlockSpec((num_layers, 1, C), lambda i: (0, 0, 0)),
            pl.BlockSpec((C, LOC_PAD), lambda i: (0, 0)),
            pl.BlockSpec((1, LOC_PAD), lambda i: (0, 0)),
        ],
        out_specs=(pl.BlockSpec((tile, C), lambda i: (i, 0)),
                   pl.BlockSpec((tile, LOC_PAD), lambda i: (i, 0))),
        compiler_params=_compiler_params(block_bytes),
    )(xa, wa, sel, gbar, whl, bhl, lgl, lbl, wol, bol)


# -----------------------------------------------------------------------------
# Kernel B: quad + class heads on gathered features, with fused epilogue
# -----------------------------------------------------------------------------
def _quad_class_kernel(x_ref, off_ref, wh_ref, bh_ref, lg_ref, lb_ref,
                       woq_ref, boq_ref, woc_ref, boc_ref,
                       quad_ref, cls_ref, *, num_layers, num_channels,
                       full_w, full_h):
    inv_c = 1.0 / num_channels

    def run_head(head):
        h = x_ref[...]                                      # bf16, no f32 round-trip
        for l in range(num_layers):
            z = jnp.dot(h, wh_ref[head, l],
                        preferred_element_type=jnp.float32) + bh_ref[head, l]
            s1 = jnp.sum(z, axis=-1, keepdims=True)
            s2 = jnp.sum(z * z, axis=-1, keepdims=True)
            mu = s1 * inv_c
            var = s2 * inv_c - mu * mu
            z = (z - mu) * jax.lax.rsqrt(var + LN_EPS)
            z = z * lg_ref[head, l] + lb_ref[head, l]
            h = (z * jax.nn.sigmoid(z)).astype(jnp.bfloat16)
        return h

    # quad head + fused epilogue: tanh, offset add, image-size scaling
    hq = run_head(0)
    yq = jnp.dot(hq, woq_ref[...], preferred_element_type=jnp.float32) + boq_ref[...]
    lane = jax.lax.broadcasted_iota(jnp.int32, yq.shape, 1)
    scale = jnp.where(lane % 2 == 0, jnp.float32(full_w), jnp.float32(full_h))
    quad_ref[...] = (jnp.tanh(yq) + off_ref[...]) * scale

    # class head + fused argmax (first max index, matching torch .max indices)
    hc = run_head(1)
    yc = jnp.dot(hc, woc_ref[...], preferred_element_type=jnp.float32) + boc_ref[...]
    cmax = jnp.max(yc, axis=-1, keepdims=True)
    cl = jax.lax.broadcasted_iota(jnp.int32, yc.shape, 1)
    idx = jnp.min(jnp.where(yc == cmax, cl, yc.shape[-1]), axis=-1, keepdims=True)
    cls_ref[...] = idx.astype(jnp.int32)


def fused_quad_class(x, offs, params, *, num_layers, num_channels, num_classes,
                     full_w, full_h):
    R, C = x.shape
    L = num_layers
    tile = R if R <= ROW_TILE else ROW_TILE
    grid = R // tile
    block_bytes = (tile * C * 2 + 2 * tile * QUAD_DIM * 4 + tile * 4
                   + 2 * L * C * C * 2 + 6 * L * C * 4
                   + C * (QUAD_DIM + num_classes) * 2)
    kern = functools.partial(_quad_class_kernel, num_layers=L, num_channels=C,
                             full_w=full_w, full_h=full_h)
    return pl.pallas_call(
        kern,
        out_shape=(jax.ShapeDtypeStruct((R, QUAD_DIM), jnp.float32),
                   jax.ShapeDtypeStruct((R, 1), jnp.int32)),
        grid=(grid,),
        in_specs=[
            pl.BlockSpec((tile, C), lambda i: (i, 0)),
            pl.BlockSpec((tile, QUAD_DIM), lambda i: (i, 0)),
            pl.BlockSpec((2, L, C, C), lambda i: (0, 0, 0, 0)),
            pl.BlockSpec((2, L, 1, C), lambda i: (0, 0, 0, 0)),
            pl.BlockSpec((2, L, 1, C), lambda i: (0, 0, 0, 0)),
            pl.BlockSpec((2, L, 1, C), lambda i: (0, 0, 0, 0)),
            pl.BlockSpec((C, QUAD_DIM), lambda i: (0, 0)),
            pl.BlockSpec((1, QUAD_DIM), lambda i: (0, 0)),
            pl.BlockSpec((C, num_classes), lambda i: (0, 0)),
            pl.BlockSpec((1, num_classes), lambda i: (0, 0)),
        ],
        out_specs=(pl.BlockSpec((tile, QUAD_DIM), lambda i: (i, 0)),
                   pl.BlockSpec((tile, 1), lambda i: (i, 0))),
        compiler_params=_compiler_params(block_bytes),
    )(x, offs, params["qc_wh"], params["qc_bh"], params["qc_lg"], params["qc_lb"],
      params["q_wo"], params["q_bo"], params["c_wo"], params["c_bo"])


# -----------------------------------------------------------------------------
# Parameters (deterministic; Conv+BN folded; packed for the fused kernels)
# -----------------------------------------------------------------------------
def init_params(key, in_channels, levels, top_level, C, L, num_classes):
    keys = iter(jax.random.split(key, 64))

    def randn(shape, scale):
        return jax.random.normal(next(keys), shape, jnp.float32) * scale

    cins = [in_channels[lvl] for lvl in levels]
    sum_cin = sum(cins)
    n_lvl = len(levels)
    ka = _round_up(sum_cin + n_lvl, 8)          # level channel blocks + bias cols
    cin_top = in_channels[top_level]

    # Laterals: folded Conv1x1+BN weights in disjoint row blocks, biases in
    # the per-level indicator rows.
    wa = jnp.zeros((ka, C), jnp.float32)
    off = 0
    for i, cin in enumerate(cins):
        wa = wa.at[off:off + cin].set(randn((cin, C), 0.1))
        wa = wa.at[sum_cin + i].set(randn((C,), 0.01))
        off += cin

    # Global-context Conv1x1+BN (folded) weight & bias (conv+SiLU+mean run in XLA).
    wg = randn((cin_top, C), 0.1)
    bg = randn((1, C), 0.01)

    def mlp(out_dim, out_pad):
        wh = randn((L, C, C), 0.1)
        bh = jnp.zeros((L, 1, C), jnp.float32)
        lg = jnp.ones((L, 1, C), jnp.float32)
        lb = jnp.zeros((L, 1, C), jnp.float32)
        wo = jnp.zeros((C, out_pad), jnp.float32).at[:, :out_dim].set(
            randn((C, out_dim), 0.1))
        bo = jnp.zeros((1, out_pad), jnp.float32).at[0, :out_dim].set(
            randn((out_dim,), 0.01))
        return wh, bh, lg, lb, wo, bo

    loc = mlp(1, LOC_PAD)
    quad = mlp(QUAD_DIM, QUAD_DIM)
    cls = mlp(num_classes, num_classes)

    return {
        "wa": wa.astype(jnp.bfloat16),
        "wg": wg.astype(jnp.bfloat16),
        "bg": bg,
        "loc": (loc[0].astype(jnp.bfloat16), loc[1], loc[2], loc[3],
                loc[4].astype(jnp.bfloat16), loc[5]),
        # quad & class hidden layers stacked on a leading axis; separate narrow
        # output projections (no wasted 256-wide matmul).
        "qc_wh": jnp.stack([quad[0], cls[0]]).astype(jnp.bfloat16),   # (2,L,C,C)
        "qc_bh": jnp.stack([quad[1], cls[1]]),                        # (2,L,1,C)
        "qc_lg": jnp.stack([quad[2], cls[2]]),
        "qc_lb": jnp.stack([quad[3], cls[3]]),
        "q_wo": quad[4].astype(jnp.bfloat16),                         # (C, 8)
        "q_bo": quad[5],                                              # (1, 8)
        "c_wo": cls[4].astype(jnp.bfloat16),                          # (C, num_classes)
        "c_bo": cls[5],                                               # (1, num_classes)
    }


# -----------------------------------------------------------------------------
# Forward pass (mirrors QuadrilateralDetection.forward)
# -----------------------------------------------------------------------------
def quad_detection_forward(inputs, params, *, bottom_level, top_level,
                           num_channels, num_layers, num_classes, max_instances):
    B = inputs[0].shape[0]
    full_h, full_w = inputs[0].shape[2], inputs[0].shape[3]
    levels = list(range(bottom_level, top_level + 1))
    C = num_channels
    cins = [inputs[lvl].shape[1] for lvl in levels]
    sum_cin = sum(cins)
    ka = params["wa"].shape[0]

    def to_tokens(x):  # NCHW -> (B, H*W, C)
        b, c, h, w = x.shape
        return jnp.transpose(x, (0, 2, 3, 1)).reshape(b, h * w, c)

    # ---- pack every level's tokens into one bf16 (B*N, ka) matrix ----------
    tok_blocks, offsets_list, hw_sizes = [], [], []
    ch_off = 0
    for i, lvl in enumerate(levels):
        x = inputs[lvl]
        _, cin, h, w = x.shape
        hw = h * w
        t = to_tokens(x).astype(jnp.bfloat16)                     # (B, hw, cin)
        blk = jnp.pad(t, ((0, 0), (0, 0), (ch_off, ka - ch_off - cin)))
        blk = blk.at[:, :, sum_cin + i].set(1.0)                  # per-level bias col
        tok_blocks.append(blk)
        ch_off += cin
        hw_sizes.append(hw)
        ys = (jnp.arange(h, dtype=jnp.float32) + 0.5) / h
        xs = (jnp.arange(w, dtype=jnp.float32) + 0.5) / w
        gx, gy = jnp.meshgrid(xs, ys)
        offsets_list.append(jnp.stack([gx, gy], axis=-1).reshape(hw, 2))

    N = sum(hw_sizes)
    rows = B * N
    tile = _pick_tile(rows)
    R = _round_up(rows, tile)
    xa = jnp.concatenate(tok_blocks, axis=1).reshape(rows, ka)
    xa = jnp.pad(xa, ((0, R - rows), (0, 0)))

    # per-row one-hot batch selector (rows are batch-major)
    sel = jnp.repeat(jnp.eye(B, dtype=jnp.bfloat16), N, axis=0)   # (rows, B)
    sel = jnp.pad(sel, ((0, R - rows), (0, 0)))

    # ---- global-context branch in XLA: Conv1x1+SiLU -> per-batch mean ------
    x_top = inputs[top_level]
    top_tok = to_tokens(x_top).astype(jnp.bfloat16)               # (B, hw_top, cin_top)
    g = jnp.einsum("bnc,cd->bnd", top_tok, params["wg"],
                   preferred_element_type=jnp.float32) + params["bg"]
    g = g * jax.nn.sigmoid(g)
    gbar = jnp.mean(g, axis=1).astype(jnp.bfloat16)               # (B, C)

    rel_offsets = jnp.tile(jnp.concatenate(offsets_list, axis=0), (1, 4))  # (N, 8)
    # NOTE: the per-anchor `levels` tensor is gathered in the PyTorch forward
    # but never used in its outputs, so it is omitted here.

    # ---- launch 1: laterals + gctx broadcast + loc head ---------------------
    feats_flat, loc_flat = fused_lateral_loc(
        xa, params["wa"], sel, gbar, params["loc"],
        num_layers=num_layers, num_channels=C)

    loc_logits_all = loc_flat[:rows, 0].reshape(B, N)
    loc_logits, loc_idxs = jax.lax.top_k(loc_logits_all, max_instances)
    scores = jax.nn.sigmoid(loc_logits)                           # (B, M)
    num_instances = jnp.sum(scores > 0.5, axis=1).astype(jnp.int32)

    flat_idx = (loc_idxs + jnp.arange(B)[:, None] * N).reshape(-1)     # (B*M,)
    gathered = jnp.take(feats_flat[:rows], flat_idx, axis=0)           # (B*M, C) bf16
    offsets = jnp.take(rel_offsets, loc_idxs, axis=0).reshape(-1, 8)   # (B*M, 8)

    rows_h = B * max_instances
    tile_h = _pick_tile(rows_h)
    Rh = _round_up(rows_h, tile_h)
    gathered = jnp.pad(gathered, ((0, Rh - rows_h), (0, 0)))
    offsets = jnp.pad(offsets, ((0, Rh - rows_h), (0, 0)))

    # ---- launch 2: fused quad + class heads + in-kernel epilogue ------------
    quad_out, cls_out = fused_quad_class(
        gathered, offsets, params, num_layers=num_layers, num_channels=C,
        num_classes=num_classes, full_w=full_w, full_h=full_h)

    quad_preds = quad_out[:rows_h].reshape(B, max_instances, 4, 2)
    classes = cls_out[:rows_h, 0].reshape(B, max_instances)

    return num_instances, scores, classes, quad_preds


# -----------------------------------------------------------------------------
if __name__ == "__main__":
    B = 2
    in_channels = [4, 4, 4, 8, 8, 16]
    bottom_level, top_level = 3, 5
    num_channels = 128        # % 4 == 0
    num_layers = 2
    num_classes = 5
    max_instances = 16        # <= total number of anchors (84)
    full = 64

    key = jax.random.PRNGKey(0)
    in_keys = jax.random.split(key, len(in_channels) + 1)

    inputs = []
    for l, c in enumerate(in_channels):
        hw = max(full // (2 ** l), 1)
        inputs.append(jax.random.normal(in_keys[l], (B, c, hw, hw), jnp.float32))

    levels = list(range(bottom_level, top_level + 1))
    params = init_params(in_keys[-1], in_channels, levels, top_level,
                         num_channels, num_layers, num_classes)

    num_instances, scores, classes, quad_preds = quad_detection_forward(
        inputs, params,
        bottom_level=bottom_level, top_level=top_level,
        num_channels=num_channels, num_layers=num_layers,
        num_classes=num_classes, max_instances=max_instances,
    )
    jax.block_until_ready((num_instances, scores, classes, quad_preds))

    assert num_instances.shape == (B,)
    assert scores.shape == (B, max_instances)
    assert classes.shape == (B, max_instances)
    assert quad_preds.shape == (B, max_instances, 4, 2)
    print("KERNEL_OK")
</pallas_src>

<mosaic_0001>
module attributes {stable_mosaic.version = 11 : i64} {
  func.func @_lateral_loc_kernel(%arg0: i32, %arg1: memref<192x40xbf16, #tpu.memory_space<vmem>>, %arg2: memref<40x128xbf16, #tpu.memory_space<vmem>>, %arg3: memref<192x2xbf16, #tpu.memory_space<vmem>>, %arg4: memref<2x128xbf16, #tpu.memory_space<vmem>>, %arg5: memref<2x128x128xbf16, #tpu.memory_space<vmem>>, %arg6: memref<2x1x128xf32, #tpu.memory_space<vmem>>, %arg7: memref<2x1x128xf32, #tpu.memory_space<vmem>>, %arg8: memref<2x1x128xf32, #tpu.memory_space<vmem>>, %arg9: memref<128x8xbf16, #tpu.memory_space<vmem>>, %arg10: memref<1x8xf32, #tpu.memory_space<vmem>>, %arg11: memref<192x128xbf16, #tpu.memory_space<vmem>>, %arg12: memref<192x8xf32, #tpu.memory_space<vmem>>) attributes {dimension_semantics = [#tpu.dimension_semantics<parallel>], iteration_bounds = array<i64: 1>, scalar_prefetch = 0 : i64, scratch_operands = 0 : i64, tpu.core_type = #tpu.core_type<tc>, window_params = [{transform_indices = @transform_0, window_bounds = array<i64: 192, 40>}, {pipeline_mode = #tpu.pipeline_mode<synchronous>, transform_indices = @transform_1, window_bounds = array<i64: 40, 128>}, {transform_indices = @transform_2, window_bounds = array<i64: 192, 2>}, {pipeline_mode = #tpu.pipeline_mode<synchronous>, transform_indices = @transform_3, window_bounds = array<i64: 2, 128>}, {pipeline_mode = #tpu.pipeline_mode<synchronous>, transform_indices = @transform_4, window_bounds = array<i64: 2, 128, 128>}, {pipeline_mode = #tpu.pipeline_mode<synchronous>, transform_indices = @transform_5, window_bounds = array<i64: 2, 1, 128>}, {pipeline_mode = #tpu.pipeline_mode<synchronous>, transform_indices = @transform_6, window_bounds = array<i64: 2, 1, 128>}, {pipeline_mode = #tpu.pipeline_mode<synchronous>, transform_indices = @transform_7, window_bounds = array<i64: 2, 1, 128>}, {pipeline_mode = #tpu.pipeline_mode<synchronous>, transform_indices = @transform_8, window_bounds = array<i64: 128, 8>}, {pipeline_mode = #tpu.pipeline_mode<synchronous>, transform_indices = @transform_9, window_bounds = array<i64: 1, 8>}, {transform_indices = @transform_10, window_bounds = array<i64: 192, 128>}, {transform_indices = @transform_11, window_bounds = array<i64: 192, 8>}]} {
    %c0 = arith.constant 0 : index
    %c0_0 = arith.constant 0 : index
    %0 = vector.load %arg1[%c0, %c0_0] : memref<192x40xbf16, #tpu.memory_space<vmem>>, vector<192x40xbf16>
    %c0_1 = arith.constant 0 : index
    %c0_2 = arith.constant 0 : index
    %1 = vector.load %arg2[%c0_1, %c0_2] : memref<40x128xbf16, #tpu.memory_space<vmem>>, vector<40x128xbf16>
    %cst = arith.constant dense<0.000000e+00> : vector<192x128xf32>
    %2 = tpu.matmul %0, %1, %cst {dimension_numbers = #tpu.dot_dimension_numbers<[1], [0], [0], [1], [0, 0, 1, 1], [], []>} : vector<192x40xbf16>, vector<40x128xbf16>, vector<192x128xf32> -> vector<192x128xf32>
    %3 = arith.negf %2 : vector<192x128xf32>
    %4 = math.exp %3 : vector<192x128xf32>
    %cst_3 = arith.constant 1.000000e+00 : f32
    %5 = vector.broadcast %cst_3 : f32 to vector<192x128xf32>
    %6 = arith.addf %5, %4 : vector<192x128xf32>
    %7 = arith.divf %5, %6 : vector<192x128xf32>
    %8 = arith.mulf %2, %7 : vector<192x128xf32>
    %c0_4 = arith.constant 0 : index
    %c0_5 = arith.constant 0 : index
    %9 = vector.load %arg3[%c0_4, %c0_5] : memref<192x2xbf16, #tpu.memory_space<vmem>>, vector<192x2xbf16>
    %c0_6 = arith.constant 0 : index
    %c0_7 = arith.constant 0 : index
    %10 = vector.load %arg4[%c0_6, %c0_7] : memref<2x128xbf16, #tpu.memory_space<vmem>>, vector<2x128xbf16>
    %cst_8 = arith.constant dense<0.000000e+00> : vector<192x128xf32>
    %11 = tpu.matmul %9, %10, %cst_8 {dimension_numbers = #tpu.dot_dimension_numbers<[1], [0], [0], [1], [0, 0, 1, 1], [], []>} : vector<192x2xbf16>, vector<2x128xbf16>, vector<192x128xf32> -> vector<192x128xf32>
    %12 = arith.addf %8, %11 : vector<192x128xf32>
    %13 = arith.truncf %12 : vector<192x128xf32> to vector<192x128xbf16>
    %c0_9 = arith.constant 0 : index
    %c0_10 = arith.constant 0 : index
    %14 = vector.load %arg11[%c0_9, %c0_10] : memref<192x128xbf16, #tpu.memory_space<vmem>>, vector<192x128xbf16>
    tpu.vector_store %arg11[%c0_9, %c0_10], %13 {strides = array<i32>} : memref<192x128xbf16, #tpu.memory_space<vmem>>, vector<192x128xbf16>,
    %15 = arith.truncf %12 : vector<192x128xf32> to vector<192x128xbf16>
    %c0_11 = arith.constant 0 : index
    %c0_12 = arith.constant 0 : index
    %c0_13 = arith.constant 0 : index
    %16 = vector.load %arg5[%c0_11, %c0_12, %c0_13] : memref<2x128x128xbf16, #tpu.memory_space<vmem>>, vector<1x128x128xbf16>
    %17 = vector.shape_cast %16 : vector<1x128x128xbf16> to vector<128x128xbf16>
    %cst_14 = arith.constant dense<0.000000e+00> : vector<192x128xf32>
    %18 = tpu.matmul %15, %17, %cst_14 {dimension_numbers = #tpu.dot_dimension_numbers<[1], [0], [0], [1], [0, 0, 1, 1], [], []>} : vector<192x128xbf16>, vector<128x128xbf16>, vector<192x128xf32> -> vector<192x128xf32>
    %c0_15 = arith.constant 0 : index
    %c0_16 = arith.constant 0 : index
    %c0_17 = arith.constant 0 : index
    %19 = vector.load %arg6[%c0_15, %c0_16, %c0_17] : memref<2x1x128xf32, #tpu.memory_space<vmem>>, vector<1x1x128xf32>
    %20 = vector.shape_cast %19 : vector<1x1x128xf32> to vector<1x128xf32>
    %21 = vector.broadcast %20 : vector<1x128xf32> to vector<192x128xf32>
    %22 = arith.addf %18, %21 : vector<192x128xf32>
    %cst_18 = arith.constant dense<0.000000e+00> : vector<192xf32>
    %23 = vector.multi_reduction <add>, %22, %cst_18 [1] : vector<192x128xf32> to vector<192xf32>
    %24 = vector.shape_cast %23 : vector<192xf32> to vector<192x1xf32>
    %25 = arith.mulf %22, %22 : vector<192x128xf32>
    %cst_19 = arith.constant dense<0.000000e+00> : vector<192xf32>
    %26 = vector.multi_reduction <add>, %25, %cst_19 [1] : vector<192x128xf32> to vector<192xf32>
    %27 = vector.shape_cast %26 : vector<192xf32> to vector<192x1xf32>
    %cst_20 = arith.constant 7.812500e-03 : f32
    %28 = vector.broadcast %cst_20 : f32 to vector<192x1xf32>
    %29 = arith.mulf %24, %28 : vector<192x1xf32>
    %cst_21 = arith.constant 7.812500e-03 : f32
    %30 = vector.broadcast %cst_21 : f32 to vector<192x1xf32>
    %31 = arith.mulf %27, %30 : vector<192x1xf32>
    %32 = arith.mulf %29, %29 : vector<192x1xf32>
    %33 = arith.subf %31, %32 : vector<192x1xf32>
    %34 = vector.broadcast %29 : vector<192x1xf32> to vector<192x128xf32>
    %35 = arith.subf %22, %34 : vector<192x128xf32>
    %cst_22 = arith.constant 9.99999974E-6 : f32
    %36 = vector.broadcast %cst_22 : f32 to vector<192x1xf32>
    %37 = arith.addf %33, %36 : vector<192x1xf32>
    %38 = math.rsqrt %37 : vector<192x1xf32>
    %39 = vector.broadcast %38 : vector<192x1xf32> to vector<192x128xf32>
    %40 = arith.mulf %35, %39 : vector<192x128xf32>
    %c0_23 = arith.constant 0 : index
    %c0_24 = arith.constant 0 : index
    %c0_25 = arith.constant 0 : index
    %41 = vector.load %arg7[%c0_23, %c0_24, %c0_25] : memref<2x1x128xf32, #tpu.memory_space<vmem>>, vector<1x1x128xf32>
    %42 = vector.shape_cast %41 : vector<1x1x128xf32> to vector<1x128xf32>
    %43 = vector.broadcast %42 : vector<1x128xf32> to vector<192x128xf32>
    %44 = arith.mulf %40, %43 : vector<192x128xf32>
    %c0_26 = arith.constant 0 : index
    %c0_27 = arith.constant 0 : index
    %c0_28 = arith.constant 0 : index
    %45 = vector.load %arg8[%c0_26, %c0_27, %c0_28] : memref<2x1x128xf32, #tpu.memory_space<vmem>>, vector<1x1x128xf32>
    %46 = vector.shape_cast %45 : vector<1x1x128xf32> to vector<1x128xf32>
    %47 = vector.broadcast %46 : vector<1x128xf32> to vector<192x128xf32>
    %48 = arith.addf %44, %47 : vector<192x128xf32>
    %49 = arith.negf %48 : vector<192x128xf32>
    %50 = math.exp %49 : vector<192x128xf32>
    %cst_29 = arith.constant 1.000000e+00 : f32
    %51 = vector.broadcast %cst_29 : f32 to vector<192x128xf32>
    %52 = arith.addf %51, %50 : vector<192x128xf32>
    %53 = arith.divf %51, %52 : vector<192x128xf32>
    %54 = arith.mulf %48, %53 : vector<192x128xf32>
    %55 = arith.truncf %54 : vector<192x128xf32> to vector<192x128xbf16>
    %c1 = arith.constant 1 : index
    %c0_30 = arith.constant 0 : index
    %c0_31 = arith.constant 0 : index
    %56 = vector.load %arg5[%c1, %c0_30, %c0_31] : memref<2x128x128xbf16, #tpu.memory_space<vmem>>, vector<1x128x128xbf16>
    %57 = vector.shape_cast %56 : vector<1x128x128xbf16> to vector<128x128xbf16>
    %cst_32 = arith.constant dense<0.000000e+00> : vector<192x128xf32>
    %58 = tpu.matmul %55, %57, %cst_32 {dimension_numbers = #tpu.dot_dimension_numbers<[1], [0], [0], [1], [0, 0, 1, 1], [], []>} : vector<192x128xbf16>, vector<128x128xbf16>, vector<192x128xf32> -> vector<192x128xf32>
    %c1_33 = arith.constant 1 : index
    %c0_34 = arith.constant 0 : index
    %c0_35 = arith.constant 0 : index
    %59 = vector.load %arg6[%c1_33, %c0_34, %c0_35] : memref<2x1x128xf32, #tpu.memory_space<vmem>>, vector<1x1x128xf32>
    %60 = vector.shape_cast %59 : vector<1x1x128xf32> to vector<1x128xf32>
    %61 = vector.broadcast %60 : vector<1x128xf32> to vector<192x128xf32>
    %62 = arith.addf %58, %61 : vector<192x128xf32>
    %cst_36 = arith.constant dense<0.000000e+00> : vector<192xf32>
    %63 = vector.multi_reduction <add>, %62, %cst_36 [1] : vector<192x128xf32> to vector<192xf32>
    %64 = vector.shape_cast %63 : vector<192xf32> to vector<192x1xf32>
    %65 = arith.mulf %62, %62 : vector<192x128xf32>
    %cst_37 = arith.constant dense<0.000000e+00> : vector<192xf32>
    %66 = vector.multi_reduction <add>, %65, %cst_37 [1] : vector<192x128xf32> to vector<192xf32>
    %67 = vector.shape_cast %66 : vector<192xf32> to vector<192x1xf32>
    %cst_38 = arith.constant 7.812500e-03 : f32
    %68 = vector.broadcast %cst_38 : f32 to vector<192x1xf32>
    %69 = arith.mulf %64, %68 : vector<192x1xf32>
    %cst_39 = arith.constant 7.812500e-03 : f32
    %70 = vector.broadcast %cst_39 : f32 to vector<192x1xf32>
    %71 = arith.mulf %67, %70 : vector<192x1xf32>
    %72 = arith.mulf %69, %69 : vector<192x1xf32>
    %73 = arith.subf %71, %72 : vector<192x1xf32>
    %74 = vector.broadcast %69 : vector<192x1xf32> to vector<192x128xf32>
    %75 = arith.subf %62, %74 : vector<192x128xf32>
    %cst_40 = arith.constant 9.99999974E-6 : f32
    %76 = vector.broadcast %cst_40 : f32 to vector<192x1xf32>
    %77 = arith.addf %73, %76 : vector<192x1xf32>
    %78 = math.rsqrt %77 : vector<192x1xf32>
    %79 = vector.broadcast %78 : vector<192x1xf32> to vector<192x128xf32>
    %80 = arith.mulf %75, %79 : vector<192x128xf32>
    %c1_41 = arith.constant 1 : index
    %c0_42 = arith.constant 0 : index
    %c0_43 = arith.constant 0 : index
    %81 = vector.load %arg7[%c1_41, %c0_42, %c0_43] : memref<2x1x128xf32, #tpu.memory_space<vmem>>, vector<1x1x128xf32>
    %82 = vector.shape_cast %81 : vector<1x1x128xf32> to vector<1x128xf32>
    %83 = vector.broadcast %82 : vector<1x128xf32> to vector<192x128xf32>
    %84 = arith.mulf %80, %83 : vector<192x128xf32>
    %c1_44 = arith.constant 1 : index
    %c0_45 = arith.constant 0 : index
    %c0_46 = arith.constant 0 : index
    %85 = vector.load %arg8[%c1_44, %c0_45, %c0_46] : memref<2x1x128xf32, #tpu.memory_space<vmem>>, vector<1x1x128xf32>
    %86 = vector.shape_cast %85 : vector<1x1x128xf32> to vector<1x128xf32>
    %87 = vector.broadcast %86 : vector<1x128xf32> to vector<192x128xf32>
    %88 = arith.addf %84, %87 : vector<192x128xf32>
    %89 = arith.negf %88 : vector<192x128xf32>
    %90 = math.exp %89 : vector<192x128xf32>
    %cst_47 = arith.constant 1.000000e+00 : f32
    %91 = vector.broadcast %cst_47 : f32 to vector<192x128xf32>
    %92 = arith.addf %91, %90 : vector<192x128xf32>
    %93 = arith.divf %91, %92 : vector<192x128xf32>
    %94 = arith.mulf %88, %93 : vector<192x128xf32>
    %95 = arith.truncf %94 : vector<192x128xf32> to vector<192x128xbf16>
    %c0_48 = arith.constant 0 : index
    %c0_49 = arith.constant 0 : index
    %96 = vector.load %arg9[%c0_48, %c0_49] : memref<128x8xbf16, #tpu.memory_space<vmem>>, vector<128x8xbf16>
    %cst_50 = arith.constant dense<0.000000e+00> : vector<192x8xf32>
    %97 = tpu.matmul %95, %96, %cst_50 {dimension_numbers = #tpu.dot_dimension_numbers<[1], [0], [0], [1], [0, 0, 1, 1], [], []>} : vector<192x128xbf16>, vector<128x8xbf16>, vector<192x8xf32> -> vector<192x8xf32>
    %c0_51 = arith.constant 0 : index
    %c0_52 = arith.constant 0 : index
    %98 = vector.load %arg10[%c0_51, %c0_52] : memref<1x8xf32, #tpu.memory_space<vmem>>, vector<1x8xf32>
    %99 = vector.broadcast %98 : vector<1x8xf32> to vector<192x8xf32>
    %100 = arith.addf %97, %99 : vector<192x8xf32>
    %c0_53 = arith.constant 0 : index
    %c0_54 = arith.constant 0 : index
    %101 = vector.load %arg12[%c0_53, %c0_54] : memref<192x8xf32, #tpu.memory_space<vmem>>, vector<192x8xf32>
    tpu.vector_store %arg12[%c0_53, %c0_54], %100 {strides = array<i32>} : memref<192x8xf32, #tpu.memory_space<vmem>>, vector<192x8xf32>,
    return
  }
  func.func @transform_0(%arg0: i32) -> (i32, i32) {
    %c0_i32 = arith.constant 0 : i32
    %c0_i32_0 = arith.constant 0 : i32
    return %arg0, %c0_i32 : i32, i32
  }
  func.func @transform_1(%arg0: i32) -> (i32, i32) {
    %c0_i32 = arith.constant 0 : i32
    %c0_i32_0 = arith.constant 0 : i32
    %c0_i32_1 = arith.constant 0 : i32
    return %c0_i32, %c0_i32_0 : i32, i32
  }
  func.func @transform_2(%arg0: i32) -> (i32, i32) {
    %c0_i32 = arith.constant 0 : i32
    %c0_i32_0 = arith.constant 0 : i32
    return %arg0, %c0_i32 : i32, i32
  }
  func.func @transform_3(%arg0: i32) -> (i32, i32) {
    %c0_i32 = arith.constant 0 : i32
    %c0_i32_0 = arith.constant 0 : i32
    %c0_i32_1 = arith.constant 0 : i32
    return %c0_i32, %c0_i32_0 : i32, i32
  }
  func.func @transform_4(%arg0: i32) -> (i32, i32, i32) {
    %c0_i32 = arith.constant 0 : i32
    %c0_i32_0 = arith.constant 0 : i32
    %c0_i32_1 = arith.constant 0 : i32
    %c0_i32_2 = arith.constant 0 : i32
    return %c0_i32, %c0_i32_0, %c0_i32_1 : i32, i32, i32
  }
  func.func @transform_5(%arg0: i32) -> (i32, i32, i32) {
    %c0_i32 = arith.constant 0 : i32
    %c0_i32_0 = arith.constant 0 : i32
    %c0_i32_1 = arith.constant 0 : i32
    %c0_i32_2 = arith.constant 0 : i32
    return %c0_i32, %c0_i32_0, %c0_i32_1 : i32, i32, i32
  }
  func.func @transform_6(%arg0: i32) -> (i32, i32, i32) {
    %c0_i32 = arith.constant 0 : i32
    %c0_i32_0 = arith.constant 0 : i32
    %c0_i32_1 = arith.constant 0 : i32
    %c0_i32_2 = arith.constant 0 : i32
    return %c0_i32, %c0_i32_0, %c0_i32_1 : i32, i32, i32
  }
  func.func @transform_7(%arg0: i32) -> (i32, i32, i32) {
    %c0_i32 = arith.constant 0 : i32
    %c0_i32_0 = arith.constant 0 : i32
    %c0_i32_1 = arith.constant 0 : i32
    %c0_i32_2 = arith.constant 0 : i32
    return %c0_i32, %c0_i32_0, %c0_i32_1 : i32, i32, i32
  }
  func.func @transform_8(%arg0: i32) -> (i32, i32) {
    %c0_i32 = arith.constant 0 : i32
    %c0_i32_0 = arith.constant 0 : i32
    %c0_i32_1 = arith.constant 0 : i32
    return %c0_i32, %c0_i32_0 : i32, i32
  }
  func.func @transform_9(%arg0: i32) -> (i32, i32) {
    %c0_i32 = arith.constant 0 : i32
    %c0_i32_0 = arith.constant 0 : i32
    %c0_i32_1 = arith.constant 0 : i32
    return %c0_i32, %c0_i32_0 : i32, i32
  }
  func.func @transform_10(%arg0: i32) -> (i32, i32) {
    %c0_i32 = arith.constant 0 : i32
    %c0_i32_0 = arith.constant 0 : i32
    return %arg0, %c0_i32 : i32, i32
  }
  func.func @transform_11(%arg0: i32) -> (i32, i32) {
    %c0_i32 = arith.constant 0 : i32
    %c0_i32_0 = arith.constant 0 : i32
    return %arg0, %c0_i32 : i32, i32
  }
}

</mosaic_0001>

<llo_original>
// kernel: tpu_custom_call.1
$region0: #{tpu_custom_call.1}
  #allocation0 [shape = 'u32[]', space=smem, size = 0x4, offset = 0x4, fixed_abs, tag = 'smem constant byte address 0x4 - core index']
  #allocation1 [shape = 'u32[144,128]{1,0:T(1,128)}', space=vmem, size = 0x12000, scoped, tag = 'internal scratch']
  %s0 = inlined_call_operand.vmem [shape: bf16[192,40], index: 0, kind: input, shape index: {}]
  %s1 = inlined_call_operand.vmem [shape: bf16[40,128], index: 1, kind: input, shape index: {}]
  %s2 = inlined_call_operand.vmem [shape: bf16[192,2], index: 2, kind: input, shape index: {}]
  %s3 = inlined_call_operand.vmem [shape: bf16[2,128], index: 3, kind: input, shape index: {}]
  %s4 = inlined_call_operand.vmem [shape: bf16[2,128,128], index: 4, kind: input, shape index: {}]
  %s5 = inlined_call_operand.vmem [shape: f32[2,1,128], index: 5, kind: input, shape index: {}]
  %s6 = inlined_call_operand.vmem [shape: f32[2,1,128], index: 6, kind: input, shape index: {}]
  %s7 = inlined_call_operand.vmem [shape: f32[2,1,128], index: 7, kind: input, shape index: {}]
  %s8 = inlined_call_operand.vmem [shape: bf16[128,8], index: 8, kind: input, shape index: {}]
  %s9 = inlined_call_operand.vmem [shape: f32[1,8], index: 9, kind: input, shape index: {}]
  %s10 = inlined_call_operand.hbm [shape: bf16[192,128], index: 10, kind: output, shape index: {0}]
  %s11 = inlined_call_operand.vmem [shape: f32[192,8], index: 11, kind: output, shape index: {1}]
  %12 = xla_tuple %s10, %s11
  %s13 = sld [smem:[#allocation0]]
  $region58: #{tpu_custom_call.1} parent=0
    _
  %s15 = ssub.s32 1, %s13
  %s16 = scalar_select 0, %s15, %s13
  $region1: #{tpu_custom_call.1} parent=0
    #allocation2 [shape = 'u8[49152]{0}', space=vmem, size = 0xc000, scoped, tag = 'output window, operand 0, single buffered']
    #allocation3 [shape = 's32[1]{0}', space=sflag, size = 0x4, scoped, tag = 'scoped memory for tpu_custom_call.1']
    %17 = vsyncpa [#allocation3], 0
    // Predicated region
    $region2: #{tpu_custom_call.1} parent=1 // pred_check
      _
    $region3: #{tpu_custom_call.1} parent=1 // pred_check_branch
      %19 = sbr.rel (0) target = $region5
    $region4: #{tpu_custom_call.1} parent=1 // pred_region
      _
    $region5: #{tpu_custom_call.1} parent=1 // pred_fallthru
      _
    // Predicated region
    $region6: #{tpu_custom_call.1} parent=1 // pred_check
      _
    $region7: #{tpu_custom_call.1} parent=1 // pred_check_branch
      %21 = sbr.rel (0) target = $region9
    $region8: #{tpu_custom_call.1} parent=1 // pred_region
      _
    $region9: #{tpu_custom_call.1} parent=1 // pred_fallthru
      _
    // Predicated region
    $region10: #{tpu_custom_call.1} parent=1 // pred_check
      _
    $region11: #{tpu_custom_call.1} parent=1 // pred_check_branch
      %23 = sbr.rel (0) target = $region13
    $region12: #{tpu_custom_call.1} parent=1 // pred_region
      _
    $region13: #{tpu_custom_call.1} parent=1 // pred_fallthru
      _
    // Predicated region
    $region14: #{tpu_custom_call.1} parent=1 // pred_check
      _
    $region15: #{tpu_custom_call.1} parent=1 // pred_check_branch
      %25 = sbr.rel (0) target = $region17
    $region16: #{tpu_custom_call.1} parent=1 // pred_region
      _
    $region17: #{tpu_custom_call.1} parent=1 // pred_fallthru
      _
    // Predicated region
    $region18: #{tpu_custom_call.1} parent=1 // pred_check
      _
    $region19: #{tpu_custom_call.1} parent=1 // pred_check_branch
      %27 = sbr.rel (0) target = $region21
    $region20: #{tpu_custom_call.1} parent=1 // pred_region
      _
    $region21: #{tpu_custom_call.1} parent=1 // pred_fallthru
      _
    // Predicated region
    $region22: #{tpu_custom_call.1} parent=1 // pred_check
      _
    $region23: #{tpu_custom_call.1} parent=1 // pred_check_branch
      %29 = sbr.rel (0) target = $region25
    $region24: #{tpu_custom_call.1} parent=1 // pred_region
      _
    $region25: #{tpu_custom_call.1} parent=1 // pred_fallthru
      _
    // Predicated region
    $region26: #{tpu_custom_call.1} parent=1 // pred_check
      _
    $region27: #{tpu_custom_call.1} parent=1 // pred_check_branch
      %31 = sbr.rel (0) target = $region29
    $region28: #{tpu_custom_call.1} parent=1 // pred_region
      _
    $region29: #{tpu_custom_call.1} parent=1 // pred_fallthru
      _
    // Predicated region
    $region30: #{tpu_custom_call.1} parent=1 // pred_check
      _
    $region31: #{tpu_custom_call.1} parent=1 // pred_check_branch
      %33 = sbr.rel (0) target = $region33
    $region32: #{tpu_custom_call.1} parent=1 // pred_region
      _
    $region33: #{tpu_custom_call.1} parent=1 // pred_fallthru
      _
    // Predicated region
    $region34: #{tpu_custom_call.1} parent=1 // pred_check
      _
    $region35: #{tpu_custom_call.1} parent=1 // pred_check_branch
      %35 = sbr.rel (0) target = $region37
    $region36: #{tpu_custom_call.1} parent=1 // pred_region
      _
    $region37: #{tpu_custom_call.1} parent=1 // pred_fallthru
      _
    // Predicated region
    $region38: #{tpu_custom_call.1} parent=1 // pred_check
      _
    $region39: #{tpu_custom_call.1} parent=1 // pred_check_branch
      %37 = sbr.rel (0) target = $region41
    $region40: #{tpu_custom_call.1} parent=1 // pred_region
      _
    $region41: #{tpu_custom_call.1} parent=1 // pred_fallthru
      _
    %v39 = vld [vmem:[%s0] sm:$0xf]
    %v40 = vld [vmem:[%s0 + $0x4] sm:$0xf]
    %v41 = vld [vmem:[%s0 + $0x8] sm:$0xf]
    %v42 = vld [vmem:[%s0 + $0xc] sm:$0xf]
    %v43 = vld [vmem:[%s0 + $0x10] sm:$0xf]
    %v44 = vld [vmem:[%s0 + $0x14] sm:$0xf]
    %v45 = vld [vmem:[%s0 + $0x18] sm:$0xf]
    %v46 = vld [vmem:[%s0 + $0x1c] sm:$0xf]
    %v47 = vld [vmem:[%s0 + $0x20] sm:$0xf]
    %v48 = vld [vmem:[%s0 + $0x24] sm:$0xf]
    %v49 = vld [vmem:[%s0 + $0x28] sm:$0xf]
    %v50 = vld [vmem:[%s0 + $0x2c] sm:$0xf]
    %v51 = vld [vmem:[%s0 + $0x30] sm:$0xf]
    %v52 = vld [vmem:[%s0 + $0x34] sm:$0xf]
    %v53 = vld [vmem:[%s0 + $0x38] sm:$0xf]
    %v54 = vld [vmem:[%s0 + $0x3c] sm:$0xf]
    %v55 = vld [vmem:[%s0 + $0x40] sm:$0xf]
    %v56 = vld [vmem:[%s0 + $0x44] sm:$0xf]
    %v57 = vld [vmem:[%s0 + $0x48] sm:$0xf]
    %v58 = vld [vmem:[%s0 + $0x4c] sm:$0xf]
    %v59 = vld [vmem:[%s0 + $0x50] sm:$0xf]
    %v60 = vld [vmem:[%s0 + $0x54] sm:$0xf]
    %v61 = vld [vmem:[%s0 + $0x58] sm:$0xf]
    %v62 = vld [vmem:[%s0 + $0x5c] sm:$0xf]
    %v63 = vld [vmem:[%s1] sm:$0xf]
    %v64 = vld [vmem:[%s1 + $0x4] sm:$0xf]
    %v65 = vld [vmem:[%s1 + $0x8] sm:$0xf]
    %v66 = vld [vmem:[%s1 + $0xc] sm:$0xf]
    %v67 = vld [vmem:[%s1 + $0x10] sm:$0xf]
    %v92 = vunpack.c.l.b16 %v39
    %v93 = vunpack.c.l.b16 %v40
    %v94 = vunpack.c.l.b16 %v41
    %v95 = vunpack.c.l.b16 %v42
    %v96 = vunpack.c.l.b16 %v43
    %v97 = vunpack.c.l.b16 %v44
    %v98 = vunpack.c.l.b16 %v45
    %v99 = vunpack.c.l.b16 %v46
    %v100 = vunpack.c.l.b16 %v47
    %v101 = vunpack.c.l.b16 %v48
    %v102 = vunpack.c.l.b16 %v49
    %v103 = vunpack.c.l.b16 %v50
    %v104 = vunpack.c.l.b16 %v51
    %v105 = vunpack.c.l.b16 %v52
    %v106 = vunpack.c.l.b16 %v53
    %v107 = vunpack.c.l.b16 %v54
    %v108 = vunpack.c.l.b16 %v55
    %v109 = vunpack.c.l.b16 %v56
    %v110 = vunpack.c.l.b16 %v57
    %v111 = vunpack.c.l.b16 %v58
    %v112 = vunpack.c.l.b16 %v59
    %v113 = vunpack.c.l.b16 %v60
    %v114 = vunpack.c.l.b16 %v61
    %v115 = vunpack.c.l.b16 %v62
    %v116 = vpack.c.b16 %v93, %v92
    %v117 = vpack.c.b16 %v95, %v94
    %v118 = vpack.c.b16 %v97, %v96
    %v119 = vpack.c.b16 %v99, %v98
    %v120 = vpack.c.b16 %v101, %v100
    %v121 = vpack.c.b16 %v103, %v102
    %v122 = vpack.c.b16 %v105, %v104
    %v123 = vpack.c.b16 %v107, %v106
    %v124 = vpack.c.b16 %v109, %v108
    %v125 = vpack.c.b16 %v111, %v110
    %v126 = vpack.c.b16 %v113, %v112
    %v127 = vpack.c.b16 %v115, %v114
    %v133 = vunpack.c.l.b16 %v63
    %v134 = vunpack.c.l.b16 %v64
    %v135 = vunpack.c.l.b16 %v65
    %v136 = vunpack.c.l.b16 %v66
    %v137 = vunpack.c.l.b16 %v67
    %v138 = vpack.c.b16 %v134, %v133
    %v139 = vpack.c.b16 %v136, %v135
    %v140 = vpack.c.b16 %v137, %v137
    %vm143 = vcmask 326656
    %v145 = vsel %vm143, %v116, 0
    %v148 = vsel %vm143, %v117, 0
    %v151 = vsel %vm143, %v118, 0
    %v154 = vsel %vm143, %v119, 0
    %v157 = vsel %vm143, %v120, 0
    %v160 = vsel %vm143, %v121, 0
    %v163 = vsel %vm143, %v122, 0
    %v166 = vsel %vm143, %v123, 0
    %v169 = vsel %vm143, %v124, 0
    %v172 = vsel %vm143, %v125, 0
    %v175 = vsel %vm143, %v126, 0
    %v178 = vsel %vm143, %v127, 0
    %vm180 = vcmask 1043456
    %v182 = vsel %vm180, %v140, 0
    %184 = vmatprep.subr.bf16.mxu0 0
    %185 = vmatpush1.bf16.msra.mxu0 %v138
    %186 = vmatprep.subr.bf16.mxu0 0
    %187 = vmatpush1.bf16.msra.mxu0 %v139
    %188 = vmatprep.subr.bf16.mxu0 0
    %189 = vmatpush1.bf16.msra.mxu0 %v182
    %190 = vmatprep.subr.bf16.mxu0 0
    %191 = vmatpush1.bf16.msra.mxu0 0
    %192 = vmatprep.subr.bf16.mxu0 0
    %193 = vmatpush1.bf16.msra.mxu0 0
    %194 = vmatprep.subr.bf16.mxu0 0
    %195 = vmatpush1.bf16.msra.mxu0 0
    %196 = vmatprep.subr.bf16.mxu0 0
    %197 = vmatpush1.bf16.msra.mxu0 0
    %198 = vmatprep.subr.bf16.mxu0 0
    %199 = vmatpush1.bf16.msra.mxu0 0
    %200 = vmatprep.subr.bf16.mxu0 0
    %201 = vmatpush1.bf16.msra.mxu0 0
    %202 = vmatprep.subr.bf16.mxu0 0
    %203 = vmatpush1.bf16.msra.mxu0 0
    %204 = vmatprep.subr.bf16.mxu0 0
    %205 = vmatpush1.bf16.msra.mxu0 0
    %206 = vmatprep.subr.bf16.mxu0 0
    %207 = vmatpush1.bf16.msra.mxu0 0
    %208 = vmatprep.subr.bf16.mxu0 0
    %209 = vmatpush1.bf16.msra.mxu0 0
    %210 = vmatprep.subr.bf16.mxu0 0
    %211 = vmatpush1.bf16.msra.mxu0 0
    %212 = vmatprep.subr.bf16.mxu0 0
    %213 = vmatpush1.bf16.msra.mxu0 0
    %214 = vmatprep.subr.bf16.mxu0 0
    %215 = vmatpush1.bf16.msra.mxu0 0
    %216 = vmatprep.mubr.bf16.mxu0 0
    %217 = vmatmul.mubr.bf16.gmra.mrb[0].mxu0 %v145
    %v218 = vpop.f32.mrb[0].mxu0
    %v219 = vadd.f32 0.0, %v218
    %v220 = vpop.f32.mrb[0].mxu0
    %v221 = vpop.f32.mrb[0].mxu0
    %v222 = vadd.f32 0.0, %v221
    %v223 = vpop.f32.mrb[0].mxu0
    %224 = vmatprep.mubr.bf16.mxu0 0
    %225 = vmatmul.mubr.bf16.gmra.mrb[0].mxu0 %v148
    %v226 = vpop.f32.mrb[0].mxu0
    %v227 = vadd.f32 0.0, %v226
    %v228 = vpop.f32.mrb[0].mxu0
    %v229 = vpop.f32.mrb[0].mxu0
    %v230 = vadd.f32 0.0, %v229
    %v231 = vpop.f32.mrb[0].mxu0
    %232 = vmatprep.mubr.bf16.mxu0 0
    %233 = vmatmul.mubr.bf16.gmra.mrb[0].mxu0 %v151
    %v234 = vpop.f32.mrb[0].mxu0
    %v235 = vadd.f32 0.0, %v234
    %v236 = vpop.f32.mrb[0].mxu0
    %v237 = vpop.f32.mrb[0].mxu0
    %v238 = vadd.f32 0.0, %v237
    %v239 = vpop.f32.mrb[0].mxu0
    %240 = vmatprep.mubr.bf16.mxu0 0
    %241 = vmatmul.mubr.bf16.gmra.mrb[0].mxu0 %v154
    %v242 = vpop.f32.mrb[0].mxu0
    %v243 = vadd.f32 0.0, %v242
    %v244 = vpop.f32.mrb[0].mxu0
    %v245 = vpop.f32.mrb[0].mxu0
    %v246 = vadd.f32 0.0, %v245
    %v247 = vpop.f32.mrb[0].mxu0
    %248 = vmatprep.mubr.bf16.mxu0 0
    %249 = vmatmul.mubr.bf16.gmra.mrb[0].mxu0 %v157
    %v250 = vpop.f32.mrb[0].mxu0
    %v251 = vadd.f32 0.0, %v250
    %v252 = vpop.f32.mrb[0].mxu0
    %v253 = vpop.f32.mrb[0].mxu0
    %v254 = vadd.f32 0.0, %v253
    %v255 = vpop.f32.mrb[0].mxu0
    %256 = vmatprep.mubr.bf16.mxu0 0
    %257 = vmatmul.mubr.bf16.gmra.mrb[0].mxu0 %v160
    %v258 = vpop.f32.mrb[0].mxu0
    %v259 = vadd.f32 0.0, %v258
    %v260 = vpop.f32.mrb[0].mxu0
    %v261 = vpop.f32.mrb[0].mxu0
    %v262 = vadd.f32 0.0, %v261
    %v263 = vpop.f32.mrb[0].mxu0
    %264 = vmatprep.mubr.bf16.mxu0 0
    %265 = vmatmul.mubr.bf16.gmra.mrb[0].mxu0 %v163
    %v266 = vpop.f32.mrb[0].mxu0
    %v267 = vadd.f32 0.0, %v266
    %v268 = vpop.f32.mrb[0].mxu0
    %v269 = vpop.f32.mrb[0].mxu0
    %v270 = vadd.f32 0.0, %v269
    %v271 = vpop.f32.mrb[0].mxu0
    %272 = vmatprep.mubr.bf16.mxu0 0
    %273 = vmatmul.mubr.bf16.gmra.mrb[0].mxu0 %v166
    %v274 = vpop.f32.mrb[0].mxu0
    %v275 = vadd.f32 0.0, %v274
    %v276 = vpop.f32.mrb[0].mxu0
    %v277 = vpop.f32.mrb[0].mxu0
    %v278 = vadd.f32 0.0, %v277
    %v279 = vpop.f32.mrb[0].mxu0
    %280 = vmatprep.mubr.bf16.mxu0 0
    %281 = vmatmul.mubr.bf16.gmra.mrb[0].mxu0 %v169
    %v282 = vpop.f32.mrb[0].mxu0
    %v283 = vadd.f32 0.0, %v282
    %v284 = vpop.f32.mrb[0].mxu0
    %v285 = vpop.f32.mrb[0].mxu0
    %v286 = vadd.f32 0.0, %v285
    %v287 = vpop.f32.mrb[0].mxu0
    %288 = vmatprep.mubr.bf16.mxu0 0
    %289 = vmatmul.mubr.bf16.gmra.mrb[0].mxu0 %v172
    %v290 = vpop.f32.mrb[0].mxu0
    %v291 = vadd.f32 0.0, %v290
    %v292 = vpop.f32.mrb[0].mxu0
    %v293 = vpop.f32.mrb[0].mxu0
    %v294 = vadd.f32 0.0, %v293
    %v295 = vpop.f32.mrb[0].mxu0
    %296 = vmatprep.mubr.bf16.mxu0 0
    %297 = vmatmul.mubr.bf16.gmra.mrb[0].mxu0 %v175
    %v298 = vpop.f32.mrb[0].mxu0
    %v299 = vadd.f32 0.0, %v298
    %v300 = vpop.f32.mrb[0].mxu0
    %v301 = vpop.f32.mrb[0].mxu0
    %v302 = vadd.f32 0.0, %v301
    %v303 = vpop.f32.mrb[0].mxu0
    %304 = vmatprep.mubr.bf16.mxu0 0
    %305 = vmatmul.mubr.bf16.gmra.mrb[0].mxu0 %v178
    %v306 = vpop.f32.mrb[0].mxu0
    %v307 = vadd.f32 0.0, %v306
    %v308 = vpop.f32.mrb[0].mxu0
    %v309 = vpop.f32.mrb[0].mxu0
    %v310 = vadd.f32 0.0, %v309
    %v311 = vpop.f32.mrb[0].mxu0
    %312 = vdwg.mxu0
    %v313 = vxor.u32 %v219, 2147483648
    %v314 = vxor.u32 %v222, 2147483648
    %v315 = vxor.u32 %v227, 2147483648
    %v316 = vxor.u32 %v230, 2147483648
    %v317 = vxor.u32 %v235, 2147483648
    %v318 = vxor.u32 %v238, 2147483648
    %v319 = vxor.u32 %v243, 2147483648
    %v320 = vxor.u32 %v246, 2147483648
    %v321 = vxor.u32 %v251, 2147483648
    %v322 = vxor.u32 %v254, 2147483648
    %v323 = vxor.u32 %v259, 2147483648
    %v324 = vxor.u32 %v262, 2147483648
    %v325 = vxor.u32 %v267, 2147483648
    %v326 = vxor.u32 %v270, 2147483648
    %v327 = vxor.u32 %v275, 2147483648
    %v328 = vxor.u32 %v278, 2147483648
    %v329 = vxor.u32 %v283, 2147483648
    %v330 = vxor.u32 %v286, 2147483648
    %v331 = vxor.u32 %v291, 2147483648
    %v332 = vxor.u32 %v294, 2147483648
    %v333 = vxor.u32 %v299, 2147483648
    %v334 = vxor.u32 %v302, 2147483648
    %v335 = vxor.u32 %v307, 2147483648
    %v336 = vxor.u32 %v310, 2147483648
    %v337 = vmul.f32 %v313, 1.442695
    %v338 = vpow.pop %v337
    %v339 = vmul.f32 %v314, 1.442695
    %v340 = vpow.pop %v339
    %v341 = vmul.f32 %v315, 1.442695
    %v342 = vpow.pop %v341
    %v343 = vmul.f32 %v316, 1.442695
    %v344 = vpow.pop %v343
    %v345 = vmul.f32 %v317, 1.442695
    %v346 = vpow.pop %v345
    %v347 = vmul.f32 %v318, 1.442695
    %v348 = vpow.pop %v347
    %v349 = vmul.f32 %v319, 1.442695
    %v350 = vpow.pop %v349
    %v351 = vmul.f32 %v320, 1.442695
    %v352 = vpow.pop %v351
    %v353 = vmul.f32 %v321, 1.442695
    %v354 = vpow.pop %v353
    %v355 = vmul.f32 %v322, 1.442695
    %v356 = vpow.pop %v355
    %v357 = vmul.f32 %v323, 1.442695
    %v358 = vpow.pop %v357
    %v359 = vmul.f32 %v324, 1.442695
    %v360 = vpow.pop %v359
    %v361 = vmul.f32 %v325, 1.442695
    %v362 = vpow.pop %v361
    %v363 = vmul.f32 %v326, 1.442695
    %v364 = vpow.pop %v363
    %v365 = vmul.f32 %v327, 1.442695
    %v366 = vpow.pop %v365
    %v367 = vmul.f32 %v328, 1.442695
    %v368 = vpow.pop %v367
    %v369 = vmul.f32 %v329, 1.442695
    %v370 = vpow.pop %v369
    %v371 = vmul.f32 %v330, 1.442695
    %v372 = vpow.pop %v371
    %v373 = vmul.f32 %v331, 1.442695
    %v374 = vpow.pop %v373
    %v375 = vmul.f32 %v332, 1.442695
    %v376 = vpow.pop %v375
    %v377 = vmul.f32 %v333, 1.442695
    %v378 = vpow.pop %v377
    %v379 = vmul.f32 %v334, 1.442695
    %v380 = vpow.pop %v379
    %v381 = vmul.f32 %v335, 1.442695
    %v382 = vpow.pop %v381
    %v383 = vmul.f32 %v336, 1.442695
    %v384 = vpow.pop %v383
    %v385 = vadd.f32 %v338, 1.0
    %v386 = vadd.f32 %v340, 1.0
    %v387 = vadd.f32 %v342, 1.0
    %v388 = vadd.f32 %v344, 1.0
    %v389 = vadd.f32 %v346, 1.0
    %v390 = vadd.f32 %v348, 1.0
    %v391 = vadd.f32 %v350, 1.0
    %v392 = vadd.f32 %v352, 1.0
    %v393 = vadd.f32 %v354, 1.0
    %v394 = vadd.f32 %v356, 1.0
    %v395 = vadd.f32 %v358, 1.0
    %v396 = vadd.f32 %v360, 1.0
    %v397 = vadd.f32 %v362, 1.0
    %v398 = vadd.f32 %v364, 1.0
    %v399 = vadd.f32 %v366, 1.0
    %v400 = vadd.f32 %v368, 1.0
    %v401 = vadd.f32 %v370, 1.0
    %v402 = vadd.f32 %v372, 1.0
    %v403 = vadd.f32 %v374, 1.0
    %v404 = vadd.f32 %v376, 1.0
    %v405 = vadd.f32 %v378, 1.0
    %v406 = vadd.f32 %v380, 1.0
    %v407 = vadd.f32 %v382, 1.0
    %v408 = vadd.f32 %v384, 1.0
    %v409 = vrcp.pop %v385
    %v410 = vmul.f32 1.0, %v409
    %v411 = vrcp.pop %v386
    %v412 = vmul.f32 1.0, %v411
    %v413 = vrcp.pop %v387
    %v414 = vmul.f32 1.0, %v413
    %v415 = vrcp.pop %v388
    %v416 = vmul.f32 1.0, %v415
    %v417 = vrcp.pop %v389
    %v418 = vmul.f32 1.0, %v417
    %v419 = vrcp.pop %v390
    %v420 = vmul.f32 1.0, %v419
    %v421 = vrcp.pop %v391
    %v422 = vmul.f32 1.0, %v421
    %v423 = vrcp.pop %v392
    %v424 = vmul.f32 1.0, %v423
    %v425 = vrcp.pop %v393
    %v426 = vmul.f32 1.0, %v425
    %v427 = vrcp.pop %v394
    %v428 = vmul.f32 1.0, %v427
    %v429 = vrcp.pop %v395
    %v430 = vmul.f32 1.0, %v429
    %v431 = vrcp.pop %v396
    %v432 = vmul.f32 1.0, %v431
    %v433 = vrcp.pop %v397
    %v434 = vmul.f32 1.0, %v433
    %v435 = vrcp.pop %v398
    %v436 = vmul.f32 1.0, %v435
    %v437 = vrcp.pop %v399
    %v438 = vmul.f32 1.0, %v437
    %v439 = vrcp.pop %v400
    %v440 = vmul.f32 1.0, %v439
    %v441 = vrcp.pop %v401
    %v442 = vmul.f32 1.0, %v441
    %v443 = vrcp.pop %v402
    %v444 = vmul.f32 1.0, %v443
    %v445 = vrcp.pop %v403
    %v446 = vmul.f32 1.0, %v445
    %v447 = vrcp.pop %v404
    %v448 = vmul.f32 1.0, %v447
    %v449 = vrcp.pop %v405
    %v450 = vmul.f32 1.0, %v449
    %v451 = vrcp.pop %v406
    %v452 = vmul.f32 1.0, %v451
    %v453 = vrcp.pop %v407
    %v454 = vmul.f32 1.0, %v453
    %v455 = vrcp.pop %v408
    %v456 = vmul.f32 1.0, %v455
    %v457 = vmul.f32 %v219, %v410
    %v458 = vmul.f32 %v222, %v412
    %v459 = vmul.f32 %v227, %v414
    %v460 = vmul.f32 %v230, %v416
    %v461 = vmul.f32 %v235, %v418
    %v462 = vmul.f32 %v238, %v420
    %v463 = vmul.f32 %v243, %v422
    %v464 = vmul.f32 %v246, %v424
    %v465 = vmul.f32 %v251, %v426
    %v466 = vmul.f32 %v254, %v428
    %v467 = vmul.f32 %v259, %v430
    %v468 = vmul.f32 %v262, %v432
    %v469 = vmul.f32 %v267, %v434
    %v470 = vmul.f32 %v270, %v436
    %v471 = vmul.f32 %v275, %v438
    %v472 = vmul.f32 %v278, %v440
    %v473 = vmul.f32 %v283, %v442
    %v474 = vmul.f32 %v286, %v444
    %v475 = vmul.f32 %v291, %v446
    %v476 = vmul.f32 %v294, %v448
    %v477 = vmul.f32 %v299, %v450
    %v478 = vmul.f32 %v302, %v452
    %v479 = vmul.f32 %v307, %v454
    %v480 = vmul.f32 %v310, %v456
    %v481 = vld [vmem:[%s2] sm:$0xf]
    %v482 = vld [vmem:[%s2 + $0x4] sm:$0xf]
    %v483 = vld [vmem:[%s2 + $0x8] sm:$0xf]
    %v484 = vld [vmem:[%s2 + $0xc] sm:$0xf]
    %v485 = vld [vmem:[%s2 + $0x10] sm:$0xf]
    %v486 = vld [vmem:[%s2 + $0x14] sm:$0xf]
    %v487 = vld [vmem:[%s2 + $0x18] sm:$0xf]
    %v488 = vld [vmem:[%s2 + $0x1c] sm:$0xf]
    %v489 = vld [vmem:[%s2 + $0x20] sm:$0xf]
    %v490 = vld [vmem:[%s2 + $0x24] sm:$0xf]
    %v491 = vld [vmem:[%s2 + $0x28] sm:$0xf]
    %v492 = vld [vmem:[%s2 + $0x2c] sm:$0xf]
    %v493 = vld [vmem:[%s2 + $0x30] sm:$0xf]
    %v494 = vld [vmem:[%s2 + $0x34] sm:$0xf]
    %v495 = vld [vmem:[%s2 + $0x38] sm:$0xf]
    %v496 = vld [vmem:[%s2 + $0x3c] sm:$0xf]
    %v497 = vld [vmem:[%s2 + $0x40] sm:$0xf]
    %v498 = vld [vmem:[%s2 + $0x44] sm:$0xf]
    %v499 = vld [vmem:[%s2 + $0x48] sm:$0xf]
    %v500 = vld [vmem:[%s2 + $0x4c] sm:$0xf]
    %v501 = vld [vmem:[%s2 + $0x50] sm:$0xf]
    %v502 = vld [vmem:[%s2 + $0x54] sm:$0xf]
    %v503 = vld [vmem:[%s2 + $0x58] sm:$0xf]
    %v504 = vld [vmem:[%s2 + $0x5c] sm:$0xf]
    %v505 = vld [vmem:[%s3] sm:$0x1]
    %v530 = vunpack.c.l.b16 %v481
    %v531 = vunpack.c.l.b16 %v482
    %v532 = vunpack.c.l.b16 %v483
    %v533 = vunpack.c.l.b16 %v484
    %v534 = vunpack.c.l.b16 %v485
    %v535 = vunpack.c.l.b16 %v486
    %v536 = vunpack.c.l.b16 %v487
    %v537 = vunpack.c.l.b16 %v488
    %v538 = vunpack.c.l.b16 %v489
    %v539 = vunpack.c.l.b16 %v490
    %v540 = vunpack.c.l.b16 %v491
    %v541 = vunpack.c.l.b16 %v492
    %v542 = vunpack.c.l.b16 %v493
    %v543 = vunpack.c.l.b16 %v494
    %v544 = vunpack.c.l.b16 %v495
    %v545 = vunpack.c.l.b16 %v496
    %v546 = vunpack.c.l.b16 %v497
    %v547 = vunpack.c.l.b16 %v498
    %v548 = vunpack.c.l.b16 %v499
    %v549 = vunpack.c.l.b16 %v500
    %v550 = vunpack.c.l.b16 %v501
    %v551 = vunpack.c.l.b16 %v502
    %v552 = vunpack.c.l.b16 %v503
    %v553 = vunpack.c.l.b16 %v504
    %v554 = vpack.c.b16 %v531, %v530
    %v555 = vpack.c.b16 %v533, %v532
    %v556 = vpack.c.b16 %v535, %v534
    %v557 = vpack.c.b16 %v537, %v536
    %v558 = vpack.c.b16 %v539, %v538
    %v559 = vpack.c.b16 %v541, %v540
    %v560 = vpack.c.b16 %v543, %v542
    %v561 = vpack.c.b16 %v545, %v544
    %v562 = vpack.c.b16 %v547, %v546
    %v563 = vpack.c.b16 %v549, %v548
    %v564 = vpack.c.b16 %v551, %v550
    %v565 = vpack.c.b16 %v553, %v552
    %vm566 = vcmask 15360
    %v568 = vsel %vm566, %v554, 0
    %v571 = vsel %vm566, %v555, 0
    %v574 = vsel %vm566, %v556, 0
    %v577 = vsel %vm566, %v557, 0
    %v580 = vsel %vm566, %v558, 0
    %v583 = vsel %vm566, %v559, 0
    %v586 = vsel %vm566, %v560, 0
    %v589 = vsel %vm566, %v561, 0
    %v592 = vsel %vm566, %v562, 0
    %v595 = vsel %vm566, %v563, 0
    %v598 = vsel %vm566, %v564, 0
    %v601 = vsel %vm566, %v565, 0
    %vm603 = vcmask 1040384
    %v605 = vsel %vm603, %v505, 0
    %607 = vmatprep.subr.bf16.mxu0 0
    %608 = vmatpush1.bf16.msra.mxu0 %v605
    %609 = vmatprep.subr.bf16.mxu0 0
    %610 = vmatpush1.bf16.msra.mxu0 0
    %611 = vmatprep.subr.bf16.mxu0 0
    %612 = vmatpush1.bf16.msra.mxu0 0
    %613 = vmatprep.subr.bf16.mxu0 0
    %614 = vmatpush1.bf16.msra.mxu0 0
    %615 = vmatprep.subr.bf16.mxu0 0
    %616 = vmatpush1.bf16.msra.mxu0 0
    %617 = vmatprep.subr.bf16.mxu0 0
    %618 = vmatpush1.bf16.msra.mxu0 0
    %619 = vmatprep.subr.bf16.mxu0 0
    %620 = vmatpush1.bf16.msra.mxu0 0
    %621 = vmatprep.subr.bf16.mxu0 0
    %622 = vmatpush1.bf16.msra.mxu0 0
    %623 = vmatprep.subr.bf16.mxu0 0
    %624 = vmatpush1.bf16.msra.mxu0 0
    %625 = vmatprep.subr.bf16.mxu0 0
    %626 = vmatpush1.bf16.msra.mxu0 0
    %627 = vmatprep.subr.bf16.mxu0 0
    %628 = vmatpush1.bf16.msra.mxu0 0
    %629 = vmatprep.subr.bf16.mxu0 0
    %630 = vmatpush1.bf16.msra.mxu0 0
    %631 = vmatprep.subr.bf16.mxu0 0
    %632 = vmatpush1.bf16.msra.mxu0 0
    %633 = vmatprep.subr.bf16.mxu0 0
    %634 = vmatpush1.bf16.msra.mxu0 0
    %635 = vmatprep.subr.bf16.mxu0 0
    %636 = vmatpush1.bf16.msra.mxu0 0
    %637 = vmatprep.subr.bf16.mxu0 0
    %638 = vmatpush1.bf16.msra.mxu0 0
    %639 = vmatprep.mubr.bf16.mxu0 0
    %640 = vmatmul.mubr.bf16.gmra.mrb[0].mxu0 %v568
    %v641 = vpop.f32.mrb[0].mxu0
    %v642 = vadd.f32 0.0, %v641
    %v643 = vpop.f32.mrb[0].mxu0
    %v644 = vpop.f32.mrb[0].mxu0
    %v645 = vadd.f32 0.0, %v644
    %v646 = vpop.f32.mrb[0].mxu0
    %647 = vmatprep.mubr.bf16.mxu0 0
    %648 = vmatmul.mubr.bf16.gmra.mrb[0].mxu0 %v571
    %v649 = vpop.f32.mrb[0].mxu0
    %v650 = vadd.f32 0.0, %v649
    %v651 = vpop.f32.mrb[0].mxu0
    %v652 = vpop.f32.mrb[0].mxu0
    %v653 = vadd.f32 0.0, %v652
    %v654 = vpop.f32.mrb[0].mxu0
    %655 = vmatprep.mubr.bf16.mxu0 0
    %656 = vmatmul.mubr.bf16.gmra.mrb[0].mxu0 %v574
    %v657 = vpop.f32.mrb[0].mxu0
    %v658 = vadd.f32 0.0, %v657
    %v659 = vpop.f32.mrb[0].mxu0
    %v660 = vpop.f32.mrb[0].mxu0
    %v661 = vadd.f32 0.0, %v660
    %v662 = vpop.f32.mrb[0].mxu0
    %663 = vmatprep.mubr.bf16.mxu0 0
    %664 = vmatmul.mubr.bf16.gmra.mrb[0].mxu0 %v577
    %v665 = vpop.f32.mrb[0].mxu0
    %v666 = vadd.f32 0.0, %v665
    %v667 = vpop.f32.mrb[0].mxu0
    %v668 = vpop.f32.mrb[0].mxu0
    %v669 = vadd.f32 0.0, %v668
    %v670 = vpop.f32.mrb[0].mxu0
    %671 = vmatprep.mubr.bf16.mxu0 0
    %672 = vmatmul.mubr.bf16.gmra.mrb[0].mxu0 %v580
    %v673 = vpop.f32.mrb[0].mxu0
    %v674 = vadd.f32 0.0, %v673
    %v675 = vpop.f32.mrb[0].mxu0
    %v676 = vpop.f32.mrb[0].mxu0
    %v677 = vadd.f32 0.0, %v676
    %v678 = vpop.f32.mrb[0].mxu0
    %679 = vmatprep.mubr.bf16.mxu0 0
    %680 = vmatmul.mubr.bf16.gmra.mrb[0].mxu0 %v583
    %v681 = vpop.f32.mrb[0].mxu0
    %v682 = vadd.f32 0.0, %v681
    %v683 = vpop.f32.mrb[0].mxu0
    %v684 = vpop.f32.mrb[0].mxu0
    %v685 = vadd.f32 0.0, %v684
    %v686 = vpop.f32.mrb[0].mxu0
    %687 = vmatprep.mubr.bf16.mxu0 0
    %688 = vmatmul.mubr.bf16.gmra.mrb[0].mxu0 %v586
    %v689 = vpop.f32.mrb[0].mxu0
    %v690 = vadd.f32 0.0, %v689
    %v691 = vpop.f32.mrb[0].mxu0
    %v692 = vpop.f32.mrb[0].mxu0
    %v693 = vadd.f32 0.0, %v692
    %v694 = vpop.f32.mrb[0].mxu0
    %695 = vmatprep.mubr.bf16.mxu0 0
    %696 = vmatmul.mubr.bf16.gmra.mrb[0].mxu0 %v589
    %v697 = vpop.f32.mrb[0].mxu0
    %v698 = vadd.f32 0.0, %v697
    %v699 = vpop.f32.mrb[0].mxu0
    %v700 = vpop.f32.mrb[0].mxu0
    %v701 = vadd.f32 0.0, %v700
    %v702 = vpop.f32.mrb[0].mxu0
    %703 = vmatprep.mubr.bf16.mxu0 0
    %704 = vmatmul.mubr.bf16.gmra.mrb[0].mxu0 %v592
    %v705 = vpop.f32.mrb[0].mxu0
    %v706 = vadd.f32 0.0, %v705
    %v707 = vpop.f32.mrb[0].mxu0
    %v708 = vpop.f32.mrb[0].mxu0
    %v709 = vadd.f32 0.0, %v708
    %v710 = vpop.f32.mrb[0].mxu0
    %711 = vmatprep.mubr.bf16.mxu0 0
    %712 = vmatmul.mubr.bf16.gmra.mrb[0].mxu0 %v595
    %v713 = vpop.f32.mrb[0].mxu0
    %v714 = vadd.f32 0.0, %v713
    %v715 = vpop.f32.mrb[0].mxu0
    %v716 = vpop.f32.mrb[0].mxu0
    %v717 = vadd.f32 0.0, %v716
    %v718 = vpop.f32.mrb[0].mxu0
    %719 = vmatprep.mubr.bf16.mxu0 0
    %720 = vmatmul.mubr.bf16.gmra.mrb[0].mxu0 %v598
    %v721 = vpop.f32.mrb[0].mxu0
    %v722 = vadd.f32 0.0, %v721
    %v723 = vpop.f32.mrb[0].mxu0
    %v724 = vpop.f32.mrb[0].mxu0
    %v725 = vadd.f32 0.0, %v724
    %v726 = vpop.f32.mrb[0].mxu0
    %727 = vmatprep.mubr.bf16.mxu0 0
    %728 = vmatmul.mubr.bf16.gmra.mrb[0].mxu0 %v601
    %v729 = vpop.f32.mrb[0].mxu0
    %v730 = vadd.f32 0.0, %v729
    %v731 = vpop.f32.mrb[0].mxu0
    %v732 = vpop.f32.mrb[0].mxu0
    %v733 = vadd.f32 0.0, %v732
    %v734 = vpop.f32.mrb[0].mxu0
    %735 = vdwg.mxu0
    %v736 = vadd.f32 %v457, %v642
    %v737 = vadd.f32 %v458, %v645
    %v738 = vadd.f32 %v459, %v650
    %v739 = vadd.f32 %v460, %v653
    %v740 = vadd.f32 %v461, %v658
    %v741 = vadd.f32 %v462, %v661
    %v742 = vadd.f32 %v463, %v666
    %v743 = vadd.f32 %v464, %v669
    %v744 = vadd.f32 %v465, %v674
    %v745 = vadd.f32 %v466, %v677
    %v746 = vadd.f32 %v467, %v682
    %v747 = vadd.f32 %v468, %v685
    %v748 = vadd.f32 %v469, %v690
    %v749 = vadd.f32 %v470, %v693
    %v750 = vadd.f32 %v471, %v698
    %v751 = vadd.f32 %v472, %v701
    %v752 = vadd.f32 %v473, %v706
    %v753 = vadd.f32 %v474, %v709
    %v754 = vadd.f32 %v475, %v714
    %v755 = vadd.f32 %v476, %v717
    %v756 = vadd.f32 %v477, %v722
    %v757 = vadd.f32 %v478, %v725
    %v758 = vadd.f32 %v479, %v730
    %v759 = vadd.f32 %v480, %v733
    %v760 = vpack.c.bf16 %v737, %v736
    %v761 = vpack.c.bf16 %v739, %v738
    %v762 = vpack.c.bf16 %v741, %v740
    %v763 = vpack.c.bf16 %v743, %v742
    %v764 = vpack.c.bf16 %v745, %v744
    %v765 = vpack.c.bf16 %v747, %v746
    %v766 = vpack.c.bf16 %v749, %v748
    %v767 = vpack.c.bf16 %v751, %v750
    %v768 = vpack.c.bf16 %v753, %v752
    %v769 = vpack.c.bf16 %v755, %v754
    %v770 = vpack.c.bf16 %v757, %v756
    %v771 = vpack.c.bf16 %v759, %v758
    %v784 = vunpack.c.l.b16 %v760
    %v785 = vunpack.c.h.b16 %v760
    %v786 = vunpack.c.l.b16 %v761
    %v787 = vunpack.c.h.b16 %v761
    %v788 = vunpack.c.l.b16 %v762
    %v789 = vunpack.c.h.b16 %v762
    %v790 = vunpack.c.l.b16 %v763
    %v791 = vunpack.c.h.b16 %v763
    %v792 = vunpack.c.l.b16 %v764
    %v793 = vunpack.c.h.b16 %v764
    %v794 = vunpack.c.l.b16 %v765
    %v795 = vunpack.c.h.b16 %v765
    %v796 = vunpack.c.l.b16 %v766
    %v797 = vunpack.c.h.b16 %v766
    %v798 = vunpack.c.l.b16 %v767
    %v799 = vunpack.c.h.b16 %v767
    %v800 = vunpack.c.l.b16 %v768
    %v801 = vunpack.c.h.b16 %v768
    %v802 = vunpack.c.l.b16 %v769
    %v803 = vunpack.c.h.b16 %v769
    %v804 = vunpack.c.l.b16 %v770
    %v805 = vunpack.c.h.b16 %v770
    %v806 = vunpack.c.l.b16 %v771
    %v807 = vunpack.c.h.b16 %v771
    %v808 = vpack.c.b16 %v784, %v784
    %v809 = vpack.c.b16 %v785, %v785
    %v810 = vpack.c.b16 %v786, %v786
    %v811 = vpack.c.b16 %v787, %v787
    %v812 = vpack.c.b16 %v788, %v788
    %v813 = vpack.c.b16 %v789, %v789
    %v814 = vpack.c.b16 %v790, %v790
    %v815 = vpack.c.b16 %v791, %v791
    %v816 = vpack.c.b16 %v792, %v792
    %v817 = vpack.c.b16 %v793, %v793
    %v818 = vpack.c.b16 %v794, %v794
    %v819 = vpack.c.b16 %v795, %v795
    %v820 = vpack.c.b16 %v796, %v796
    %v821 = vpack.c.b16 %v797, %v797
    %v822 = vpack.c.b16 %v798, %v798
    %v823 = vpack.c.b16 %v799, %v799
    %v824 = vpack.c.b16 %v800, %v800
    %v825 = vpack.c.b16 %v801, %v801
    %v826 = vpack.c.b16 %v802, %v802
    %v827 = vpack.c.b16 %v803, %v803
    %v828 = vpack.c.b16 %v804, %v804
    %v829 = vpack.c.b16 %v805, %v805
    %v830 = vpack.c.b16 %v806, %v806
    %v831 = vpack.c.b16 %v807, %v807
    %856 = vst [vmem:[#allocation2] sm:$0xf] %v808
    %857 = vst [vmem:[#allocation2 + $0x4] sm:$0xf] %v809
    %858 = vst [vmem:[#allocation2 + $0x8] sm:$0xf] %v810
    %859 = vst [vmem:[#allocation2 + $0xc] sm:$0xf] %v811
    %860 = vst [vmem:[#allocation2 + $0x10] sm:$0xf] %v812
    %861 = vst [vmem:[#allocation2 + $0x14] sm:$0xf] %v813
    %862 = vst [vmem:[#allocation2 + $0x18] sm:$0xf] %v814
    %863 = vst [vmem:[#allocation2 + $0x1c] sm:$0xf] %v815
    %864 = vst [vmem:[#allocation2 + $0x20] sm:$0xf] %v816
    %865 = vst [vmem:[#allocation2 + $0x24] sm:$0xf] %v817
    %866 = vst [vmem:[#allocation2 + $0x28] sm:$0xf] %v818
    %867 = vst [vmem:[#allocation2 + $0x2c] sm:$0xf] %v819
    %868 = vst [vmem:[#allocation2 + $0x30] sm:$0xf] %v820
    %869 = vst [vmem:[#allocation2 + $0x34] sm:$0xf] %v821
    %870 = vst [vmem:[#allocation2 + $0x38] sm:$0xf] %v822
    %871 = vst [vmem:[#allocation2 + $0x3c] sm:$0xf] %v823
    %872 = vst [vmem:[#allocation2 + $0x40] sm:$0xf] %v824
    %873 = vst [vmem:[#allocation2 + $0x44] sm:$0xf] %v825
    %874 = vst [vmem:[#allocation2 + $0x48] sm:$0xf] %v826
    %875 = vst [vmem:[#allocation2 + $0x4c] sm:$0xf] %v827
    %876 = vst [vmem:[#allocation2 + $0x50] sm:$0xf] %v828
    %877 = vst [vmem:[#allocation2 + $0x54] sm:$0xf] %v829
    %878 = vst [vmem:[#allocation2 + $0x58] sm:$0xf] %v830
    %879 = vst [vmem:[#allocation2 + $0x5c] sm:$0xf] %v831
    %v880 = vld [vmem:[%s4] sm:$0xf]
    %v881 = vld [vmem:[%s4 + $0x4] sm:$0xf]
    %v882 = vld [vmem:[%s4 + $0x8] sm:$0xf]
    %v883 = vld [vmem:[%s4 + $0xc] sm:$0xf]
    %v884 = vld [vmem:[%s4 + $0x10] sm:$0xf]
    %v885 = vld [vmem:[%s4 + $0x14] sm:$0xf]
    %v886 = vld [vmem:[%s4 + $0x18] sm:$0xf]
    %v887 = vld [vmem:[%s4 + $0x1c] sm:$0xf]
    %v888 = vld [vmem:[%s4 + $0x20] sm:$0xf]
    %v889 = vld [vmem:[%s4 + $0x24] sm:$0xf]
    %v890 = vld [vmem:[%s4 + $0x28] sm:$0xf]
    %v891 = vld [vmem:[%s4 + $0x2c] sm:$0xf]
    %v892 = vld [vmem:[%s4 + $0x30] sm:$0xf]
    %v893 = vld [vmem:[%s4 + $0x34] sm:$0xf]
    %v894 = vld [vmem:[%s4 + $0x38] sm:$0xf]
    %v895 = vld [vmem:[%s4 + $0x3c] sm:$0xf]
    %v896 = vld [vmem:[%s5] sm:$0x1]
    %v898 = vlaneseq
    %v899 = vshrl.u32 %v898, 7
    %v900 = vsub.s32 0, %v899
    %v901 = vrot.slane %v896, %v900
    %v919 = vunpack.c.l.b16 %v880
    %v920 = vunpack.c.l.b16 %v881
    %v921 = vunpack.c.l.b16 %v882
    %v922 = vunpack.c.l.b16 %v883
    %v923 = vunpack.c.l.b16 %v884
    %v924 = vunpack.c.l.b16 %v885
    %v925 = vunpack.c.l.b16 %v886
    %v926 = vunpack.c.l.b16 %v887
    %v927 = vunpack.c.l.b16 %v888
    %v928 = vunpack.c.l.b16 %v889
    %v929 = vunpack.c.l.b16 %v890
    %v930 = vunpack.c.l.b16 %v891
    %v931 = vunpack.c.l.b16 %v892
    %v932 = vunpack.c.l.b16 %v893
    %v933 = vunpack.c.l.b16 %v894
    %v934 = vunpack.c.l.b16 %v895
    %v935 = vpack.c.b16 %v920, %v919
    %v936 = vpack.c.b16 %v922, %v921
    %v937 = vpack.c.b16 %v924, %v923
    %v938 = vpack.c.b16 %v926, %v925
    %v939 = vpack.c.b16 %v928, %v927
    %v940 = vpack.c.b16 %v930, %v929
    %v941 = vpack.c.b16 %v932, %v931
    %v942 = vpack.c.b16 %v934, %v933
    %951 = vmatprep.subr.bf16.mxu0 0
    %952 = vmatpush1.bf16.msra.mxu0 %v935
    %953 = vmatprep.subr.bf16.mxu0 0
    %954 = vmatpush1.bf16.msra.mxu0 %v936
    %955 = vmatprep.subr.bf16.mxu0 0
    %956 = vmatpush1.bf16.msra.mxu0 %v937
    %957 = vmatprep.subr.bf16.mxu0 0
    %958 = vmatpush1.bf16.msra.mxu0 %v938
    %959 = vmatprep.subr.bf16.mxu0 0
    %960 = vmatpush1.bf16.msra.mxu0 %v939
    %961 = vmatprep.subr.bf16.mxu0 0
    %962 = vmatpush1.bf16.msra.mxu0 %v940
    %963 = vmatprep.subr.bf16.mxu0 0
    %964 = vmatpush1.bf16.msra.mxu0 %v941
    %965 = vmatprep.subr.bf16.mxu0 0
    %966 = vmatpush1.bf16.msra.mxu0 %v942
    %967 = vmatprep.subr.bf16.mxu0 0
    %968 = vmatpush1.bf16.msra.mxu0 0
    %969 = vmatprep.subr.bf16.mxu0 0
    %970 = vmatpush1.bf16.msra.mxu0 0
    %971 = vmatprep.subr.bf16.mxu0 0
    %972 = vmatpush1.bf16.msra.mxu0 0
    %973 = vmatprep.subr.bf16.mxu0 0
    %974 = vmatpush1.bf16.msra.mxu0 0
    %975 = vmatprep.subr.bf16.mxu0 0
    %976 = vmatpush1.bf16.msra.mxu0 0
    %977 = vmatprep.subr.bf16.mxu0 0
    %978 = vmatpush1.bf16.msra.mxu0 0
    %979 = vmatprep.subr.bf16.mxu0 0
    %980 = vmatpush1.bf16.msra.mxu0 0
    %981 = vmatprep.subr.bf16.mxu0 0
    %982 = vmatpush1.bf16.msra.mxu0 0
    %983 = vmatprep.mubr.bf16.mxu0 0
    %984 = vmatmul.mubr.bf16.gmra.mrb[0].mxu0 %v760
    %v985 = vpop.f32.mrb[0].mxu0
    %v986 = vadd.f32 %v901, %v985
    %v987 = vpop.f32.mrb[0].mxu0
    %v988 = vpop.f32.mrb[0].mxu0
    %v989 = vadd.f32 %v901, %v988
    %v990 = vpop.f32.mrb[0].mxu0
    %991 = vmatprep.mubr.bf16.mxu0 0
    %992 = vmatmul.mubr.bf16.gmra.mrb[0].mxu0 %v761
    %v993 = vpop.f32.mrb[0].mxu0
    %v994 = vadd.f32 %v901, %v993
    %v995 = vpop.f32.mrb[0].mxu0
    %v996 = vpop.f32.mrb[0].mxu0
    %v997 = vadd.f32 %v901, %v996
    %v998 = vpop.f32.mrb[0].mxu0
    %999 = vmatprep.mubr.bf16.mxu0 0
    %1000 = vmatmul.mubr.bf16.gmra.mrb[0].mxu0 %v762
    %v1001 = vpop.f32.mrb[0].mxu0
    %v1002 = vadd.f32 %v901, %v1001
    %v1003 = vpop.f32.mrb[0].mxu0
    %v1004 = vpop.f32.mrb[0].mxu0
    %v1005 = vadd.f32 %v901, %v1004
    %v1006 = vpop.f32.mrb[0].mxu0
    %1007 = vmatprep.mubr.bf16.mxu0 0
    %1008 = vmatmul.mubr.bf16.gmra.mrb[0].mxu0 %v763
    %v1009 = vpop.f32.mrb[0].mxu0
    %v1010 = vadd.f32 %v901, %v1009
    %v1011 = vpop.f32.mrb[0].mxu0
    %v1012 = vpop.f32.mrb[0].mxu0
    %v1013 = vadd.f32 %v901, %v1012
    %v1014 = vpop.f32.mrb[0].mxu0
    %1015 = vmatprep.mubr.bf16.mxu0 0
    %1016 = vmatmul.mubr.bf16.gmra.mrb[0].mxu0 %v764
    %v1017 = vpop.f32.mrb[0].mxu0
    %v1018 = vadd.f32 %v901, %v1017
    %v1019 = vpop.f32.mrb[0].mxu0
    %v1020 = vpop.f32.mrb[0].mxu0
    %v1021 = vadd.f32 %v901, %v1020
    %v1022 = vpop.f32.mrb[0].mxu0
    %1023 = vmatprep.mubr.bf16.mxu0 0
    %1024 = vmatmul.mubr.bf16.gmra.mrb[0].mxu0 %v765
    %v1025 = vpop.f32.mrb[0].mxu0
    %v1026 = vadd.f32 %v901, %v1025
    %v1027 = vpop.f32.mrb[0].mxu0
    %v1028 = vpop.f32.mrb[0].mxu0
    %v1029 = vadd.f32 %v901, %v1028
    %v1030 = vpop.f32.mrb[0].mxu0
    %1031 = vmatprep.mubr.bf16.mxu0 0
    %1032 = vmatmul.mubr.bf16.gmra.mrb[0].mxu0 %v766
    %v1033 = vpop.f32.mrb[0].mxu0
    %v1034 = vadd.f32 %v901, %v1033
    %v1035 = vpop.f32.mrb[0].mxu0
    %v1036 = vpop.f32.mrb[0].mxu0
    %v1037 = vadd.f32 %v901, %v1036
    %v1038 = vpop.f32.mrb[0].mxu0
    %1039 = vmatprep.mubr.bf16.mxu0 0
    %1040 = vmatmul.mubr.bf16.gmra.mrb[0].mxu0 %v767
    %v1041 = vpop.f32.mrb[0].mxu0
    %v1042 = vadd.f32 %v901, %v1041
    %v1043 = vpop.f32.mrb[0].mxu0
    %v1044 = vpop.f32.mrb[0].mxu0
    %v1045 = vadd.f32 %v901, %v1044
    %v1046 = vpop.f32.mrb[0].mxu0
    %1047 = vmatprep.mubr.bf16.mxu0 0
    %1048 = vmatmul.mubr.bf16.gmra.mrb[0].mxu0 %v768
    %v1049 = vpop.f32.mrb[0].mxu0
    %v1050 = vadd.f32 %v901, %v1049
    %v1051 = vpop.f32.mrb[0].mxu0
    %v1052 = vpop.f32.mrb[0].mxu0
    %v1053 = vadd.f32 %v901, %v1052
    %v1054 = vpop.f32.mrb[0].mxu0
    %1055 = vmatprep.mubr.bf16.mxu0 0
    %1056 = vmatmul.mubr.bf16.gmra.mrb[0].mxu0 %v769
    %v1057 = vpop.f32.mrb[0].mxu0
    %v1058 = vadd.f32 %v901, %v1057
    %v1059 = vpop.f32.mrb[0].mxu0
    %v1060 = vpop.f32.mrb[0].mxu0
    %v1061 = vadd.f32 %v901, %v1060
    %v1062 = vpop.f32.mrb[0].mxu0
    %1063 = vmatprep.mubr.bf16.mxu0 0
    %1064 = vmatmul.mubr.bf16.gmra.mrb[0].mxu0 %v770
    %v1065 = vpop.f32.mrb[0].mxu0
    %v1066 = vadd.f32 %v901, %v1065
    %v1067 = vpop.f32.mrb[0].mxu0
    %v1068 = vpop.f32.mrb[0].mxu0
    %v1069 = vadd.f32 %v901, %v1068
    %v1070 = vpop.f32.mrb[0].mxu0
    %1071 = vmatprep.mubr.bf16.mxu0 0
    %1072 = vmatmul.mubr.bf16.gmra.mrb[0].mxu0 %v771
    %v1073 = vpop.f32.mrb[0].mxu0
    %v1074 = vadd.f32 %v901, %v1073
    %v1075 = vpop.f32.mrb[0].mxu0
    %v1076 = vpop.f32.mrb[0].mxu0
    %v1077 = vadd.f32 %v901, %v1076
    %v1078 = vpop.f32.mrb[0].mxu0
    %1079 = vdwg.mxu0
    %1080 = vadd.xlane.f32.xlu0 %v986
    %v1081 = vpop.xlane.xlu0 %1080
    %1082 = vadd.xlane.f32.xlu0 %v989
    %v1083 = vpop.xlane.xlu0 %1082
    %1084 = vadd.xlane.f32.xlu0 %v994
    %v1085 = vpop.xlane.xlu0 %1084
    %1086 = vadd.xlane.f32.xlu0 %v997
    %v1087 = vpop.xlane.xlu0 %1086
    %1088 = vadd.xlane.f32.xlu0 %v1002
    %v1089 = vpop.xlane.xlu0 %1088
    %1090 = vadd.xlane.f32.xlu0 %v1005
    %v1091 = vpop.xlane.xlu0 %1090
    %1092 = vadd.xlane.f32.xlu0 %v1010
    %v1093 = vpop.xlane.xlu0 %1092
    %1094 = vadd.xlane.f32.xlu0 %v1013
    %v1095 = vpop.xlane.xlu0 %1094
    %1096 = vadd.xlane.f32.xlu0 %v1018
    %v1097 = vpop.xlane.xlu0 %1096
    %1098 = vadd.xlane.f32.xlu0 %v1021
    %v1099 = vpop.xlane.xlu0 %1098
    %1100 = vadd.xlane.f32.xlu0 %v1026
    %v1101 = vpop.xlane.xlu0 %1100
    %1102 = vadd.xlane.f32.xlu0 %v1029
    %v1103 = vpop.xlane.xlu0 %1102
    %1104 = vadd.xlane.f32.xlu0 %v1034
    %v1105 = vpop.xlane.xlu0 %1104
    %1106 = vadd.xlane.f32.xlu0 %v1037
    %v1107 = vpop.xlane.xlu0 %1106
    %1108 = vadd.xlane.f32.xlu0 %v1042
    %v1109 = vpop.xlane.xlu0 %1108
    %1110 = vadd.xlane.f32.xlu0 %v1045
    %v1111 = vpop.xlane.xlu0 %1110
    %1112 = vadd.xlane.f32.xlu0 %v1050
    %v1113 = vpop.xlane.xlu0 %1112
    %1114 = vadd.xlane.f32.xlu0 %v1053
    %v1115 = vpop.xlane.xlu0 %1114
    %1116 = vadd.xlane.f32.xlu0 %v1058
    %v1117 = vpop.xlane.xlu0 %1116
    %1118 = vadd.xlane.f32.xlu0 %v1061
    %v1119 = vpop.xlane.xlu0 %1118
    %1120 = vadd.xlane.f32.xlu0 %v1066
    %v1121 = vpop.xlane.xlu0 %1120
    %1122 = vadd.xlane.f32.xlu0 %v1069
    %v1123 = vpop.xlane.xlu0 %1122
    %1124 = vadd.xlane.f32.xlu0 %v1074
    %v1125 = vpop.xlane.xlu0 %1124
    %1126 = vadd.xlane.f32.xlu0 %v1077
    %v1127 = vpop.xlane.xlu0 %1126
    %v1128 = vmul.f32 %v986, %v986
    %v1129 = vmul.f32 %v989, %v989
    %v1130 = vmul.f32 %v994, %v994
    %v1131 = vmul.f32 %v997, %v997
    %v1132 = vmul.f32 %v1002, %v1002
    %v1133 = vmul.f32 %v1005, %v1005
    %v1134 = vmul.f32 %v1010, %v1010
    %v1135 = vmul.f32 %v1013, %v1013
    %v1136 = vmul.f32 %v1018, %v1018
    %v1137 = vmul.f32 %v1021, %v1021
    %v1138 = vmul.f32 %v1026, %v1026
    %v1139 = vmul.f32 %v1029, %v1029
    %v1140 = vmul.f32 %v1034, %v1034
    %v1141 = vmul.f32 %v1037, %v1037
    %v1142 = vmul.f32 %v1042, %v1042
    %v1143 = vmul.f32 %v1045, %v1045
    %v1144 = vmul.f32 %v1050, %v1050
    %v1145 = vmul.f32 %v1053, %v1053
    %v1146 = vmul.f32 %v1058, %v1058
    %v1147 = vmul.f32 %v1061, %v1061
    %v1148 = vmul.f32 %v1066, %v1066
    %v1149 = vmul.f32 %v1069, %v1069
    %v1150 = vmul.f32 %v1074, %v1074
    %v1151 = vmul.f32 %v1077, %v1077
    %1152 = vadd.xlane.f32.xlu0 %v1128
    %v1153 = vpop.xlane.xlu0 %1152
    %1154 = vadd.xlane.f32.xlu0 %v1129
    %v1155 = vpop.xlane.xlu0 %1154
    %1156 = vadd.xlane.f32.xlu0 %v1130
    %v1157 = vpop.xlane.xlu0 %1156
    %1158 = vadd.xlane.f32.xlu0 %v1131
    %v1159 = vpop.xlane.xlu0 %1158
    %1160 = vadd.xlane.f32.xlu0 %v1132
    %v1161 = vpop.xlane.xlu0 %1160
    %1162 = vadd.xlane.f32.xlu0 %v1133
    %v1163 = vpop.xlane.xlu0 %1162
    %1164 = vadd.xlane.f32.xlu0 %v1134
    %v1165 = vpop.xlane.xlu0 %1164
    %1166 = vadd.xlane.f32.xlu0 %v1135
    %v1167 = vpop.xlane.xlu0 %1166
    %1168 = vadd.xlane.f32.xlu0 %v1136
    %v1169 = vpop.xlane.xlu0 %1168
    %1170 = vadd.xlane.f32.xlu0 %v1137
    %v1171 = vpop.xlane.xlu0 %1170
    %1172 = vadd.xlane.f32.xlu0 %v1138
    %v1173 = vpop.xlane.xlu0 %1172
    %1174 = vadd.xlane.f32.xlu0 %v1139
    %v1175 = vpop.xlane.xlu0 %1174
    %1176 = vadd.xlane.f32.xlu0 %v1140
    %v1177 = vpop.xlane.xlu0 %1176
    %1178 = vadd.xlane.f32.xlu0 %v1141
    %v1179 = vpop.xlane.xlu0 %1178
    %1180 = vadd.xlane.f32.xlu0 %v1142
    %v1181 = vpop.xlane.xlu0 %1180
    %1182 = vadd.xlane.f32.xlu0 %v1143
    %v1183 = vpop.xlane.xlu0 %1182
    %1184 = vadd.xlane.f32.xlu0 %v1144
    %v1185 = vpop.xlane.xlu0 %1184
    %1186 = vadd.xlane.f32.xlu0 %v1145
    %v1187 = vpop.xlane.xlu0 %1186
    %1188 = vadd.xlane.f32.xlu0 %v1146
    %v1189 = vpop.xlane.xlu0 %1188
    %1190 = vadd.xlane.f32.xlu0 %v1147
    %v1191 = vpop.xlane.xlu0 %1190
    %1192 = vadd.xlane.f32.xlu0 %v1148
    %v1193 = vpop.xlane.xlu0 %1192
    %1194 = vadd.xlane.f32.xlu0 %v1149
    %v1195 = vpop.xlane.xlu0 %1194
    %1196 = vadd.xlane.f32.xlu0 %v1150
    %v1197 = vpop.xlane.xlu0 %1196
    %1198 = vadd.xlane.f32.xlu0 %v1151
    %v1199 = vpop.xlane.xlu0 %1198
    %v1200 = vmul.f32 %v1081, 0.0078125
    %v1201 = vmul.f32 %v1083, 0.0078125
    %v1202 = vmul.f32 %v1085, 0.0078125
    %v1203 = vmul.f32 %v1087, 0.0078125
    %v1204 = vmul.f32 %v1089, 0.0078125
    %v1205 = vmul.f32 %v1091, 0.0078125
    %v1206 = vmul.f32 %v1093, 0.0078125
    %v1207 = vmul.f32 %v1095, 0.0078125
    %v1208 = vmul.f32 %v1097, 0.0078125
    %v1209 = vmul.f32 %v1099, 0.0078125
    %v1210 = vmul.f32 %v1101, 0.0078125
    %v1211 = vmul.f32 %v1103, 0.0078125
    %v1212 = vmul.f32 %v1105, 0.0078125
    %v1213 = vmul.f32 %v1107, 0.0078125
    %v1214 = vmul.f32 %v1109, 0.0078125
    %v1215 = vmul.f32 %v1111, 0.0078125
    %v1216 = vmul.f32 %v1113, 0.0078125
    %v1217 = vmul.f32 %v1115, 0.0078125
    %v1218 = vmul.f32 %v1117, 0.0078125
    %v1219 = vmul.f32 %v1119, 0.0078125
    %v1220 = vmul.f32 %v1121, 0.0078125
    %v1221 = vmul.f32 %v1123, 0.0078125
    %v1222 = vmul.f32 %v1125, 0.0078125
    %v1223 = vmul.f32 %v1127, 0.0078125
    %v1224 = vmul.f32 %v1153, 0.0078125
    %v1225 = vmul.f32 %v1155, 0.0078125
    %v1226 = vmul.f32 %v1157, 0.0078125
    %v1227 = vmul.f32 %v1159, 0.0078125
    %v1228 = vmul.f32 %v1161, 0.0078125
    %v1229 = vmul.f32 %v1163, 0.0078125
    %v1230 = vmul.f32 %v1165, 0.0078125
    %v1231 = vmul.f32 %v1167, 0.0078125
    %v1232 = vmul.f32 %v1169, 0.0078125
    %v1233 = vmul.f32 %v1171, 0.0078125
    %v1234 = vmul.f32 %v1173, 0.0078125
    %v1235 = vmul.f32 %v1175, 0.0078125
    %v1236 = vmul.f32 %v1177, 0.0078125
    %v1237 = vmul.f32 %v1179, 0.0078125
    %v1238 = vmul.f32 %v1181, 0.0078125
    %v1239 = vmul.f32 %v1183, 0.0078125
    %v1240 = vmul.f32 %v1185, 0.0078125
    %v1241 = vmul.f32 %v1187, 0.0078125
    %v1242 = vmul.f32 %v1189, 0.0078125
    %v1243 = vmul.f32 %v1191, 0.0078125
    %v1244 = vmul.f32 %v1193, 0.0078125
    %v1245 = vmul.f32 %v1195, 0.0078125
    %v1246 = vmul.f32 %v1197, 0.0078125
    %v1247 = vmul.f32 %v1199, 0.0078125
    %v1248 = vmul.f32 %v1200, %v1200
    %v1249 = vmul.f32 %v1201, %v1201
    %v1250 = vmul.f32 %v1202, %v1202
    %v1251 = vmul.f32 %v1203, %v1203
    %v1252 = vmul.f32 %v1204, %v1204
    %v1253 = vmul.f32 %v1205, %v1205
    %v1254 = vmul.f32 %v1206, %v1206
    %v1255 = vmul.f32 %v1207, %v1207
    %v1256 = vmul.f32 %v1208, %v1208
    %v1257 = vmul.f32 %v1209, %v1209
    %v1258 = vmul.f32 %v1210, %v1210
    %v1259 = vmul.f32 %v1211, %v1211
    %v1260 = vmul.f32 %v1212, %v1212
    %v1261 = vmul.f32 %v1213, %v1213
    %v1262 = vmul.f32 %v1214, %v1214
    %v1263 = vmul.f32 %v1215, %v1215
    %v1264 = vmul.f32 %v1216, %v1216
    %v1265 = vmul.f32 %v1217, %v1217
    %v1266 = vmul.f32 %v1218, %v1218
    %v1267 = vmul.f32 %v1219, %v1219
    %v1268 = vmul.f32 %v1220, %v1220
    %v1269 = vmul.f32 %v1221, %v1221
    %v1270 = vmul.f32 %v1222, %v1222
    %v1271 = vmul.f32 %v1223, %v1223
    %v1272 = vsub.f32 %v1224, %v1248
    %v1273 = vsub.f32 %v1225, %v1249
    %v1274 = vsub.f32 %v1226, %v1250
    %v1275 = vsub.f32 %v1227, %v1251
    %v1276 = vsub.f32 %v1228, %v1252
    %v1277 = vsub.f32 %v1229, %v1253
    %v1278 = vsub.f32 %v1230, %v1254
    %v1279 = vsub.f32 %v1231, %v1255
    %v1280 = vsub.f32 %v1232, %v1256
    %v1281 = vsub.f32 %v1233, %v1257
    %v1282 = vsub.f32 %v1234, %v1258
    %v1283 = vsub.f32 %v1235, %v1259
    %v1284 = vsub.f32 %v1236, %v1260
    %v1285 = vsub.f32 %v1237, %v1261
    %v1286 = vsub.f32 %v1238, %v1262
    %v1287 = vsub.f32 %v1239, %v1263
    %v1288 = vsub.f32 %v1240, %v1264
    %v1289 = vsub.f32 %v1241, %v1265
    %v1290 = vsub.f32 %v1242, %v1266
    %v1291 = vsub.f32 %v1243, %v1267
    %v1292 = vsub.f32 %v1244, %v1268
    %v1293 = vsub.f32 %v1245, %v1269
    %v1294 = vsub.f32 %v1246, %v1270
    %v1295 = vsub.f32 %v1247, %v1271
    %v1296 = vsub.f32 %v986, %v1200
    %v1297 = vsub.f32 %v989, %v1201
    %v1298 = vsub.f32 %v994, %v1202
    %v1299 = vsub.f32 %v997, %v1203
    %v1300 = vsub.f32 %v1002, %v1204
    %v1301 = vsub.f32 %v1005, %v1205
    %v1302 = vsub.f32 %v1010, %v1206
    %v1303 = vsub.f32 %v1013, %v1207
    %v1304 = vsub.f32 %v1018, %v1208
    %v1305 = vsub.f32 %v1021, %v1209
    %v1306 = vsub.f32 %v1026, %v1210
    %v1307 = vsub.f32 %v1029, %v1211
    %v1308 = vsub.f32 %v1034, %v1212
    %v1309 = vsub.f32 %v1037, %v1213
    %v1310 = vsub.f32 %v1042, %v1214
    %v1311 = vsub.f32 %v1045, %v1215
    %v1312 = vsub.f32 %v1050, %v1216
    %v1313 = vsub.f32 %v1053, %v1217
    %v1314 = vsub.f32 %v1058, %v1218
    %v1315 = vsub.f32 %v1061, %v1219
    %v1316 = vsub.f32 %v1066, %v1220
    %v1317 = vsub.f32 %v1069, %v1221
    %v1318 = vsub.f32 %v1074, %v1222
    %v1319 = vsub.f32 %v1077, %v1223
    %v1320 = vadd.f32 %v1272, 1e-05
    %v1321 = vadd.f32 %v1273, 1e-05
    %v1322 = vadd.f32 %v1274, 1e-05
    %v1323 = vadd.f32 %v1275, 1e-05
    %v1324 = vadd.f32 %v1276, 1e-05
    %v1325 = vadd.f32 %v1277, 1e-05
    %v1326 = vadd.f32 %v1278, 1e-05
    %v1327 = vadd.f32 %v1279, 1e-05
    %v1328 = vadd.f32 %v1280, 1e-05
    %v1329 = vadd.f32 %v1281, 1e-05
    %v1330 = vadd.f32 %v1282, 1e-05
    %v1331 = vadd.f32 %v1283, 1e-05
    %v1332 = vadd.f32 %v1284, 1e-05
    %v1333 = vadd.f32 %v1285, 1e-05
    %v1334 = vadd.f32 %v1286, 1e-05
    %v1335 = vadd.f32 %v1287, 1e-05
    %v1336 = vadd.f32 %v1288, 1e-05
    %v1337 = vadd.f32 %v1289, 1e-05
    %v1338 = vadd.f32 %v1290, 1e-05
    %v1339 = vadd.f32 %v1291, 1e-05
    %v1340 = vadd.f32 %v1292, 1e-05
    %v1341 = vadd.f32 %v1293, 1e-05
    %v1342 = vadd.f32 %v1294, 1e-05
    %v1343 = vadd.f32 %v1295, 1e-05
    %v1344 = vrsqrt.pop %v1320
    %v1345 = vrsqrt.pop %v1321
    %v1346 = vrsqrt.pop %v1322
    %v1347 = vrsqrt.pop %v1323
    %v1348 = vrsqrt.pop %v1324
    %v1349 = vrsqrt.pop %v1325
    %v1350 = vrsqrt.pop %v1326
    %v1351 = vrsqrt.pop %v1327
    %v1352 = vrsqrt.pop %v1328
    %v1353 = vrsqrt.pop %v1329
    %v1354 = vrsqrt.pop %v1330
    %v1355 = vrsqrt.pop %v1331
    %v1356 = vrsqrt.pop %v1332
    %v1357 = vrsqrt.pop %v1333
    %v1358 = vrsqrt.pop %v1334
    %v1359 = vrsqrt.pop %v1335
    %v1360 = vrsqrt.pop %v1336
    %v1361 = vrsqrt.pop %v1337
    %v1362 = vrsqrt.pop %v1338
    %v1363 = vrsqrt.pop %v1339
    %v1364 = vrsqrt.pop %v1340
    %v1365 = vrsqrt.pop %v1341
    %v1366 = vrsqrt.pop %v1342
    %v1367 = vrsqrt.pop %v1343
    %v1368 = vmul.f32 %v1296, %v1344
    %v1369 = vmul.f32 %v1297, %v1345
    %v1370 = vmul.f32 %v1298, %v1346
    %v1371 = vmul.f32 %v1299, %v1347
    %v1372 = vmul.f32 %v1300, %v1348
    %v1373 = vmul.f32 %v1301, %v1349
    %v1374 = vmul.f32 %v1302, %v1350
    %v1375 = vmul.f32 %v1303, %v1351
    %v1376 = vmul.f32 %v1304, %v1352
    %v1377 = vmul.f32 %v1305, %v1353
    %v1378 = vmul.f32 %v1306, %v1354
    %v1379 = vmul.f32 %v1307, %v1355
    %v1380 = vmul.f32 %v1308, %v1356
    %v1381 = vmul.f32 %v1309, %v1357
    %v1382 = vmul.f32 %v1310, %v1358
    %v1383 = vmul.f32 %v1311, %v1359
    %v1384 = vmul.f32 %v1312, %v1360
    %v1385 = vmul.f32 %v1313, %v1361
    %v1386 = vmul.f32 %v1314, %v1362
    %v1387 = vmul.f32 %v1315, %v1363
    %v1388 = vmul.f32 %v1316, %v1364
    %v1389 = vmul.f32 %v1317, %v1365
    %v1390 = vmul.f32 %v1318, %v1366
    %v1391 = vmul.f32 %v1319, %v1367
    %v1392 = vld [vmem:[%s6] sm:$0x1]
    %v1394 = vlaneseq
    %v1395 = vshrl.u32 %v1394, 7
    %v1396 = vsub.s32 0, %v1395
    %v1397 = vrot.slane %v1392, %v1396
    %v1399 = vmul.f32 %v1368, %v1397
    %v1400 = vmul.f32 %v1369, %v1397
    %v1401 = vmul.f32 %v1370, %v1397
    %v1402 = vmul.f32 %v1371, %v1397
    %v1403 = vmul.f32 %v1372, %v1397
    %v1404 = vmul.f32 %v1373, %v1397
    %v1405 = vmul.f32 %v1374, %v1397
    %v1406 = vmul.f32 %v1375, %v1397
    %v1407 = vmul.f32 %v1376, %v1397
    %v1408 = vmul.f32 %v1377, %v1397
    %v1409 = vmul.f32 %v1378, %v1397
    %v1410 = vmul.f32 %v1379, %v1397
    %v1411 = vmul.f32 %v1380, %v1397
    %v1412 = vmul.f32 %v1381, %v1397
    %v1413 = vmul.f32 %v1382, %v1397
    %v1414 = vmul.f32 %v1383, %v1397
    %v1415 = vmul.f32 %v1384, %v1397
    %v1416 = vmul.f32 %v1385, %v1397
    %v1417 = vmul.f32 %v1386, %v1397
    %v1418 = vmul.f32 %v1387, %v1397
    %v1419 = vmul.f32 %v1388, %v1397
    %v1420 = vmul.f32 %v1389, %v1397
    %v1421 = vmul.f32 %v1390, %v1397
    %v1422 = vmul.f32 %v1391, %v1397
    %v1423 = vld [vmem:[%s7] sm:$0x1]
    %v1425 = vlaneseq
    %v1426 = vshrl.u32 %v1425, 7
    %v1427 = vsub.s32 0, %v1426
    %v1428 = vrot.slane %v1423, %v1427
    %v1430 = vadd.f32 %v1399, %v1428
    %v1431 = vadd.f32 %v1400, %v1428
    %v1432 = vadd.f32 %v1401, %v1428
    %v1433 = vadd.f32 %v1402, %v1428
    %v1434 = vadd.f32 %v1403, %v1428
    %v1435 = vadd.f32 %v1404, %v1428
    %v1436 = vadd.f32 %v1405, %v1428
    %v1437 = vadd.f32 %v1406, %v1428
    %v1438 = vadd.f32 %v1407, %v1428
    %v1439 = vadd.f32 %v1408, %v1428
    %v1440 = vadd.f32 %v1409, %v1428
    %v1441 = vadd.f32 %v1410, %v1428
    %v1442 = vadd.f32 %v1411, %v1428
    %v1443 = vadd.f32 %v1412, %v1428
    %v1444 = vadd.f32 %v1413, %v1428
    %v1445 = vadd.f32 %v1414, %v1428
    %v1446 = vadd.f32 %v1415, %v1428
    %v1447 = vadd.f32 %v1416, %v1428
    %v1448 = vadd.f32 %v1417, %v1428
    %v1449 = vadd.f32 %v1418, %v1428
    %v1450 = vadd.f32 %v1419, %v1428
    %v1451 = vadd.f32 %v1420, %v1428
    %v1452 = vadd.f32 %v1421, %v1428
    %v1453 = vadd.f32 %v1422, %v1428
    %v1454 = vxor.u32 %v1430, 2147483648
    %v1455 = vxor.u32 %v1431, 2147483648
    %v1456 = vxor.u32 %v1432, 2147483648
    %v1457 = vxor.u32 %v1433, 2147483648
    %v1458 = vxor.u32 %v1434, 2147483648
    %v1459 = vxor.u32 %v1435, 2147483648
    %v1460 = vxor.u32 %v1436, 2147483648
    %v1461 = vxor.u32 %v1437, 2147483648
    %v1462 = vxor.u32 %v1438, 2147483648
    %v1463 = vxor.u32 %v1439, 2147483648
    %v1464 = vxor.u32 %v1440, 2147483648
    %v1465 = vxor.u32 %v1441, 2147483648
    %v1466 = vxor.u32 %v1442, 2147483648
    %v1467 = vxor.u32 %v1443, 2147483648
    %v1468 = vxor.u32 %v1444, 2147483648
    %v1469 = vxor.u32 %v1445, 2147483648
    %v1470 = vxor.u32 %v1446, 2147483648
    %v1471 = vxor.u32 %v1447, 2147483648
    %v1472 = vxor.u32 %v1448, 2147483648
    %v1473 = vxor.u32 %v1449, 2147483648
    %v1474 = vxor.u32 %v1450, 2147483648
    %v1475 = vxor.u32 %v1451, 2147483648
    %v1476 = vxor.u32 %v1452, 2147483648
    %v1477 = vxor.u32 %v1453, 2147483648
    %v1478 = vmul.f32 %v1454, 1.442695
    %v1479 = vpow.pop %v1478
    %v1480 = vmul.f32 %v1455, 1.442695
    %v1481 = vpow.pop %v1480
    %v1482 = vmul.f32 %v1456, 1.442695
    %v1483 = vpow.pop %v1482
    %v1484 = vmul.f32 %v1457, 1.442695
    %v1485 = vpow.pop %v1484
    %v1486 = vmul.f32 %v1458, 1.442695
    %v1487 = vpow.pop %v1486
    %v1488 = vmul.f32 %v1459, 1.442695
    %v1489 = vpow.pop %v1488
    %v1490 = vmul.f32 %v1460, 1.442695
    %v1491 = vpow.pop %v1490
    %v1492 = vmul.f32 %v1461, 1.442695
    %v1493 = vpow.pop %v1492
    %v1494 = vmul.f32 %v1462, 1.442695
    %v1495 = vpow.pop %v1494
    %v1496 = vmul.f32 %v1463, 1.442695
    %v1497 = vpow.pop %v1496
    %v1498 = vmul.f32 %v1464, 1.442695
    %v1499 = vpow.pop %v1498
    %v1500 = vmul.f32 %v1465, 1.442695
    %v1501 = vpow.pop %v1500
    %v1502 = vmul.f32 %v1466, 1.442695
    %v1503 = vpow.pop %v1502
    %v1504 = vmul.f32 %v1467, 1.442695
    %v1505 = vpow.pop %v1504
    %v1506 = vmul.f32 %v1468, 1.442695
    %v1507 = vpow.pop %v1506
    %v1508 = vmul.f32 %v1469, 1.442695
    %v1509 = vpow.pop %v1508
    %v1510 = vmul.f32 %v1470, 1.442695
    %v1511 = vpow.pop %v1510
    %v1512 = vmul.f32 %v1471, 1.442695
    %v1513 = vpow.pop %v1512
    %v1514 = vmul.f32 %v1472, 1.442695
    %v1515 = vpow.pop %v1514
    %v1516 = vmul.f32 %v1473, 1.442695
    %v1517 = vpow.pop %v1516
    %v1518 = vmul.f32 %v1474, 1.442695
    %v1519 = vpow.pop %v1518
    %v1520 = vmul.f32 %v1475, 1.442695
    %v1521 = vpow.pop %v1520
    %v1522 = vmul.f32 %v1476, 1.442695
    %v1523 = vpow.pop %v1522
    %v1524 = vmul.f32 %v1477, 1.442695
    %v1525 = vpow.pop %v1524
    %v1526 = vadd.f32 %v1479, 1.0
    %v1527 = vadd.f32 %v1481, 1.0
    %v1528 = vadd.f32 %v1483, 1.0
    %v1529 = vadd.f32 %v1485, 1.0
    %v1530 = vadd.f32 %v1487, 1.0
    %v1531 = vadd.f32 %v1489, 1.0
    %v1532 = vadd.f32 %v1491, 1.0
    %v1533 = vadd.f32 %v1493, 1.0
    %v1534 = vadd.f32 %v1495, 1.0
    %v1535 = vadd.f32 %v1497, 1.0
    %v1536 = vadd.f32 %v1499, 1.0
    %v1537 = vadd.f32 %v1501, 1.0
    %v1538 = vadd.f32 %v1503, 1.0
    %v1539 = vadd.f32 %v1505, 1.0
    %v1540 = vadd.f32 %v1507, 1.0
    %v1541 = vadd.f32 %v1509, 1.0
    %v1542 = vadd.f32 %v1511, 1.0
    %v1543 = vadd.f32 %v1513, 1.0
    %v1544 = vadd.f32 %v1515, 1.0
    %v1545 = vadd.f32 %v1517, 1.0
    %v1546 = vadd.f32 %v1519, 1.0
    %v1547 = vadd.f32 %v1521, 1.0
    %v1548 = vadd.f32 %v1523, 1.0
    %v1549 = vadd.f32 %v1525, 1.0
    %v1550 = vrcp.pop %v1526
    %v1551 = vmul.f32 1.0, %v1550
    %v1552 = vrcp.pop %v1527
    %v1553 = vmul.f32 1.0, %v1552
    %v1554 = vrcp.pop %v1528
    %v1555 = vmul.f32 1.0, %v1554
    %v1556 = vrcp.pop %v1529
    %v1557 = vmul.f32 1.0, %v1556
    %v1558 = vrcp.pop %v1530
    %v1559 = vmul.f32 1.0, %v1558
    %v1560 = vrcp.pop %v1531
    %v1561 = vmul.f32 1.0, %v1560
    %v1562 = vrcp.pop %v1532
    %v1563 = vmul.f32 1.0, %v1562
    %v1564 = vrcp.pop %v1533
    %v1565 = vmul.f32 1.0, %v1564
    %v1566 = vrcp.pop %v1534
    %v1567 = vmul.f32 1.0, %v1566
    %v1568 = vrcp.pop %v1535
    %v1569 = vmul.f32 1.0, %v1568
    %v1570 = vrcp.pop %v1536
    %v1571 = vmul.f32 1.0, %v1570
    %v1572 = vrcp.pop %v1537
    %v1573 = vmul.f32 1.0, %v1572
    %v1574 = vrcp.pop %v1538
    %v1575 = vmul.f32 1.0, %v1574
    %v1576 = vrcp.pop %v1539
    %v1577 = vmul.f32 1.0, %v1576
    %v1578 = vrcp.pop %v1540
    %v1579 = vmul.f32 1.0, %v1578
    %v1580 = vrcp.pop %v1541
    %v1581 = vmul.f32 1.0, %v1580
    %v1582 = vrcp.pop %v1542
    %v1583 = vmul.f32 1.0, %v1582
    %v1584 = vrcp.pop %v1543
    %v1585 = vmul.f32 1.0, %v1584
    %v1586 = vrcp.pop %v1544
    %v1587 = vmul.f32 1.0, %v1586
    %v1588 = vrcp.pop %v1545
    %v1589 = vmul.f32 1.0, %v1588
    %v1590 = vrcp.pop %v1546
    %v1591 = vmul.f32 1.0, %v1590
    %v1592 = vrcp.pop %v1547
    %v1593 = vmul.f32 1.0, %v1592
    %v1594 = vrcp.pop %v1548
    %v1595 = vmul.f32 1.0, %v1594
    %v1596 = vrcp.pop %v1549
    %v1597 = vmul.f32 1.0, %v1596
    %v1598 = vmul.f32 %v1430, %v1551
    %v1599 = vmul.f32 %v1431, %v1553
    %v1600 = vmul.f32 %v1432, %v1555
    %v1601 = vmul.f32 %v1433, %v1557
    %v1602 = vmul.f32 %v1434, %v1559
    %v1603 = vmul.f32 %v1435, %v1561
    %v1604 = vmul.f32 %v1436, %v1563
    %v1605 = vmul.f32 %v1437, %v1565
    %v1606 = vmul.f32 %v1438, %v1567
    %v1607 = vmul.f32 %v1439, %v1569
    %v1608 = vmul.f32 %v1440, %v1571
    %v1609 = vmul.f32 %v1441, %v1573
    %v1610 = vmul.f32 %v1442, %v1575
    %v1611 = vmul.f32 %v1443, %v1577
    %v1612 = vmul.f32 %v1444, %v1579
    %v1613 = vmul.f32 %v1445, %v1581
    %v1614 = vmul.f32 %v1446, %v1583
    %v1615 = vmul.f32 %v1447, %v1585
    %v1616 = vmul.f32 %v1448, %v1587
    %v1617 = vmul.f32 %v1449, %v1589
    %v1618 = vmul.f32 %v1450, %v1591
    %v1619 = vmul.f32 %v1451, %v1593
    %v1620 = vmul.f32 %v1452, %v1595
    %v1621 = vmul.f32 %v1453, %v1597
    %v1622 = vpack.c.bf16 %v1599, %v1598
    %v1623 = vpack.c.bf16 %v1601, %v1600
    %v1624 = vpack.c.bf16 %v1603, %v1602
    %v1625 = vpack.c.bf16 %v1605, %v1604
    %v1626 = vpack.c.bf16 %v1607, %v1606
    %v1627 = vpack.c.bf16 %v1609, %v1608
    %v1628 = vpack.c.bf16 %v1611, %v1610
    %v1629 = vpack.c.bf16 %v1613, %v1612
    %v1630 = vpack.c.bf16 %v1615, %v1614
    %v1631 = vpack.c.bf16 %v1617, %v1616
    %v1632 = vpack.c.bf16 %v1619, %v1618
    %v1633 = vpack.c.bf16 %v1621, %v1620
    %s1634 = scalar_lea.vmem %s4, 64
    %v1635 = vld [vmem:[%s1634] sm:$0xf]
    %v1636 = vld [vmem:[%s1634 + $0x4] sm:$0xf]
    %v1637 = vld [vmem:[%s1634 + $0x8] sm:$0xf]
    %v1638 = vld [vmem:[%s1634 + $0xc] sm:$0xf]
    %v1639 = vld [vmem:[%s1634 + $0x10] sm:$0xf]
    %v1640 = vld [vmem:[%s1634 + $0x14] sm:$0xf]
    %v1641 = vld [vmem:[%s1634 + $0x18] sm:$0xf]
    %v1642 = vld [vmem:[%s1634 + $0x1c] sm:$0xf]
    %v1643 = vld [vmem:[%s1634 + $0x20] sm:$0xf]
    %v1644 = vld [vmem:[%s1634 + $0x24] sm:$0xf]
    %v1645 = vld [vmem:[%s1634 + $0x28] sm:$0xf]
    %v1646 = vld [vmem:[%s1634 + $0x2c] sm:$0xf]
    %v1647 = vld [vmem:[%s1634 + $0x30] sm:$0xf]
    %v1648 = vld [vmem:[%s1634 + $0x34] sm:$0xf]
    %v1649 = vld [vmem:[%s1634 + $0x38] sm:$0xf]
    %v1650 = vld [vmem:[%s1634 + $0x3c] sm:$0xf]
    %s1651 = scalar_lea.vmem %s5, 1
    %v1652 = vld [vmem:[%s1651] sm:$0x1]
    %v1654 = vlaneseq
    %v1655 = vshrl.u32 %v1654, 7
    %v1656 = vsub.s32 0, %v1655
    %v1657 = vrot.slane %v1652, %v1656
    %v1675 = vunpack.c.l.b16 %v1635
    %v1676 = vunpack.c.l.b16 %v1636
    %v1677 = vunpack.c.l.b16 %v1637
    %v1678 = vunpack.c.l.b16 %v1638
    %v1679 = vunpack.c.l.b16 %v1639
    %v1680 = vunpack.c.l.b16 %v1640
    %v1681 = vunpack.c.l.b16 %v1641
    %v1682 = vunpack.c.l.b16 %v1642
    %v1683 = vunpack.c.l.b16 %v1643
    %v1684 = vunpack.c.l.b16 %v1644
    %v1685 = vunpack.c.l.b16 %v1645
    %v1686 = vunpack.c.l.b16 %v1646
    %v1687 = vunpack.c.l.b16 %v1647
    %v1688 = vunpack.c.l.b16 %v1648
    %v1689 = vunpack.c.l.b16 %v1649
    %v1690 = vunpack.c.l.b16 %v1650
    %v1691 = vpack.c.b16 %v1676, %v1675
    %v1692 = vpack.c.b16 %v1678, %v1677
    %v1693 = vpack.c.b16 %v1680, %v1679
    %v1694 = vpack.c.b16 %v1682, %v1681
    %v1695 = vpack.c.b16 %v1684, %v1683
    %v1696 = vpack.c.b16 %v1686, %v1685
    %v1697 = vpack.c.b16 %v1688, %v1687
    %v1698 = vpack.c.b16 %v1690, %v1689
    %1707 = vmatprep.subr.bf16.mxu0 0
    %1708 = vmatpush1.bf16.msra.mxu0 %v1691
    %1709 = vmatprep.subr.bf16.mxu0 0
    %1710 = vmatpush1.bf16.msra.mxu0 %v1692
    %1711 = vmatprep.subr.bf16.mxu0 0
    %1712 = vmatpush1.bf16.msra.mxu0 %v1693
    %1713 = vmatprep.subr.bf16.mxu0 0
    %1714 = vmatpush1.bf16.msra.mxu0 %v1694
    %1715 = vmatprep.subr.bf16.mxu0 0
    %1716 = vmatpush1.bf16.msra.mxu0 %v1695
    %1717 = vmatprep.subr.bf16.mxu0 0
    %1718 = vmatpush1.bf16.msra.mxu0 %v1696
    %1719 = vmatprep.subr.bf16.mxu0 0
    %1720 = vmatpush1.bf16.msra.mxu0 %v1697
    %1721 = vmatprep.subr.bf16.mxu0 0
    %1722 = vmatpush1.bf16.msra.mxu0 %v1698
    %1723 = vmatprep.subr.bf16.mxu0 0
    %1724 = vmatpush1.bf16.msra.mxu0 0
    %1725 = vmatprep.subr.bf16.mxu0 0
    %1726 = vmatpush1.bf16.msra.mxu0 0
    %1727 = vmatprep.subr.bf16.mxu0 0
    %1728 = vmatpush1.bf16.msra.mxu0 0
    %1729 = vmatprep.subr.bf16.mxu0 0
    %1730 = vmatpush1.bf16.msra.mxu0 0
    %1731 = vmatprep.subr.bf16.mxu0 0
    %1732 = vmatpush1.bf16.msra.mxu0 0
    %1733 = vmatprep.subr.bf16.mxu0 0
    %1734 = vmatpush1.bf16.msra.mxu0 0
    %1735 = vmatprep.subr.bf16.mxu0 0
    %1736 = vmatpush1.bf16.msra.mxu0 0
    %1737 = vmatprep.subr.bf16.mxu0 0
    %1738 = vmatpush1.bf16.msra.mxu0 0
    %1739 = vmatprep.mubr.bf16.mxu0 0
    %1740 = vmatmul.mubr.bf16.gmra.mrb[0].mxu0 %v1622
    %v1741 = vpop.f32.mrb[0].mxu0
    %v1742 = vadd.f32 %v1657, %v1741
    %v1743 = vpop.f32.mrb[0].mxu0
    %v1744 = vpop.f32.mrb[0].mxu0
    %v1745 = vadd.f32 %v1657, %v1744
    %v1746 = vpop.f32.mrb[0].mxu0
    %1747 = vmatprep.mubr.bf16.mxu0 0
    %1748 = vmatmul.mubr.bf16.gmra.mrb[0].mxu0 %v1623
    %v1749 = vpop.f32.mrb[0].mxu0
    %v1750 = vadd.f32 %v1657, %v1749
    %v1751 = vpop.f32.mrb[0].mxu0
    %v1752 = vpop.f32.mrb[0].mxu0
    %v1753 = vadd.f32 %v1657, %v1752
    %v1754 = vpop.f32.mrb[0].mxu0
    %1755 = vmatprep.mubr.bf16.mxu0 0
    %1756 = vmatmul.mubr.bf16.gmra.mrb[0].mxu0 %v1624
    %v1757 = vpop.f32.mrb[0].mxu0
    %v1758 = vadd.f32 %v1657, %v1757
    %v1759 = vpop.f32.mrb[0].mxu0
    %v1760 = vpop.f32.mrb[0].mxu0
    %v1761 = vadd.f32 %v1657, %v1760
    %v1762 = vpop.f32.mrb[0].mxu0
    %1763 = vmatprep.mubr.bf16.mxu0 0
    %1764 = vmatmul.mubr.bf16.gmra.mrb[0].mxu0 %v1625
    %v1765 = vpop.f32.mrb[0].mxu0
    %v1766 = vadd.f32 %v1657, %v1765
    %v1767 = vpop.f32.mrb[0].mxu0
    %v1768 = vpop.f32.mrb[0].mxu0
    %v1769 = vadd.f32 %v1657, %v1768
    %v1770 = vpop.f32.mrb[0].mxu0
    %1771 = vmatprep.mubr.bf16.mxu0 0
    %1772 = vmatmul.mubr.bf16.gmra.mrb[0].mxu0 %v1626
    %v1773 = vpop.f32.mrb[0].mxu0
    %v1774 = vadd.f32 %v1657, %v1773
    %v1775 = vpop.f32.mrb[0].mxu0
    %v1776 = vpop.f32.mrb[0].mxu0
    %v1777 = vadd.f32 %v1657, %v1776
    %v1778 = vpop.f32.mrb[0].mxu0
    %1779 = vmatprep.mubr.bf16.mxu0 0
    %1780 = vmatmul.mubr.bf16.gmra.mrb[0].mxu0 %v1627
    %v1781 = vpop.f32.mrb[0].mxu0
    %v1782 = vadd.f32 %v1657, %v1781
    %v1783 = vpop.f32.mrb[0].mxu0
    %v1784 = vpop.f32.mrb[0].mxu0
    %v1785 = vadd.f32 %v1657, %v1784
    %v1786 = vpop.f32.mrb[0].mxu0
    %1787 = vmatprep.mubr.bf16.mxu0 0
    %1788 = vmatmul.mubr.bf16.gmra.mrb[0].mxu0 %v1628
    %v1789 = vpop.f32.mrb[0].mxu0
    %v1790 = vadd.f32 %v1657, %v1789
    %v1791 = vpop.f32.mrb[0].mxu0
    %v1792 = vpop.f32.mrb[0].mxu0
    %v1793 = vadd.f32 %v1657, %v1792
    %v1794 = vpop.f32.mrb[0].mxu0
    %1795 = vmatprep.mubr.bf16.mxu0 0
    %1796 = vmatmul.mubr.bf16.gmra.mrb[0].mxu0 %v1629
    %v1797 = vpop.f32.mrb[0].mxu0
    %v1798 = vadd.f32 %v1657, %v1797
    %v1799 = vpop.f32.mrb[0].mxu0
    %v1800 = vpop.f32.mrb[0].mxu0
    %v1801 = vadd.f32 %v1657, %v1800
    %v1802 = vpop.f32.mrb[0].mxu0
    %1803 = vmatprep.mubr.bf16.mxu0 0
    %1804 = vmatmul.mubr.bf16.gmra.mrb[0].mxu0 %v1630
    %v1805 = vpop.f32.mrb[0].mxu0
    %v1806 = vadd.f32 %v1657, %v1805
    %v1807 = vpop.f32.mrb[0].mxu0
    %v1808 = vpop.f32.mrb[0].mxu0
    %v1809 = vadd.f32 %v1657, %v1808
    %v1810 = vpop.f32.mrb[0].mxu0
    %1811 = vmatprep.mubr.bf16.mxu0 0
    %1812 = vmatmul.mubr.bf16.gmra.mrb[0].mxu0 %v1631
    %v1813 = vpop.f32.mrb[0].mxu0
    %v1814 = vadd.f32 %v1657, %v1813
    %v1815 = vpop.f32.mrb[0].mxu0
    %v1816 = vpop.f32.mrb[0].mxu0
    %v1817 = vadd.f32 %v1657, %v1816
    %v1818 = vpop.f32.mrb[0].mxu0
    %1819 = vmatprep.mubr.bf16.mxu0 0
    %1820 = vmatmul.mubr.bf16.gmra.mrb[0].mxu0 %v1632
    %v1821 = vpop.f32.mrb[0].mxu0
    %v1822 = vadd.f32 %v1657, %v1821
    %v1823 = vpop.f32.mrb[0].mxu0
    %v1824 = vpop.f32.mrb[0].mxu0
    %v1825 = vadd.f32 %v1657, %v1824
    %v1826 = vpop.f32.mrb[0].mxu0
    %1827 = vmatprep.mubr.bf16.mxu0 0
    %1828 = vmatmul.mubr.bf16.gmra.mrb[0].mxu0 %v1633
    %v1829 = vpop.f32.mrb[0].mxu0
    %v1830 = vadd.f32 %v1657, %v1829
    %v1831 = vpop.f32.mrb[0].mxu0
    %v1832 = vpop.f32.mrb[0].mxu0
    %v1833 = vadd.f32 %v1657, %v1832
    %v1834 = vpop.f32.mrb[0].mxu0
    %1835 = vdwg.mxu0
    %1836 = vadd.xlane.f32.xlu0 %v1742
    %v1837 = vpop.xlane.xlu0 %1836
    %1838 = vadd.xlane.f32.xlu0 %v1745
    %v1839 = vpop.xlane.xlu0 %1838
    %1840 = vadd.xlane.f32.xlu0 %v1750
    %v1841 = vpop.xlane.xlu0 %1840
    %1842 = vadd.xlane.f32.xlu0 %v1753
    %v1843 = vpop.xlane.xlu0 %1842
    %1844 = vadd.xlane.f32.xlu0 %v1758
    %v1845 = vpop.xlane.xlu0 %1844
    %1846 = vadd.xlane.f32.xlu0 %v1761
    %v1847 = vpop.xlane.xlu0 %1846
    %1848 = vadd.xlane.f32.xlu0 %v1766
    %v1849 = vpop.xlane.xlu0 %1848
    %1850 = vadd.xlane.f32.xlu0 %v1769
    %v1851 = vpop.xlane.xlu0 %1850
    %1852 = vadd.xlane.f32.xlu0 %v1774
    %v1853 = vpop.xlane.xlu0 %1852
    %1854 = vadd.xlane.f32.xlu0 %v1777
    %v1855 = vpop.xlane.xlu0 %1854
    %1856 = vadd.xlane.f32.xlu0 %v1782
    %v1857 = vpop.xlane.xlu0 %1856
    %1858 = vadd.xlane.f32.xlu0 %v1785
    %v1859 = vpop.xlane.xlu0 %1858
    %1860 = vadd.xlane.f32.xlu0 %v1790
    %v1861 = vpop.xlane.xlu0 %1860
    %1862 = vadd.xlane.f32.xlu0 %v1793
    %v1863 = vpop.xlane.xlu0 %1862
    %1864 = vadd.xlane.f32.xlu0 %v1798
    %v1865 = vpop.xlane.xlu0 %1864
    %1866 = vadd.xlane.f32.xlu0 %v1801
    %v1867 = vpop.xlane.xlu0 %1866
    %1868 = vadd.xlane.f32.xlu0 %v1806
    %v1869 = vpop.xlane.xlu0 %1868
    %1870 = vadd.xlane.f32.xlu0 %v1809
    %v1871 = vpop.xlane.xlu0 %1870
    %1872 = vadd.xlane.f32.xlu0 %v1814
    %v1873 = vpop.xlane.xlu0 %1872
    %1874 = vadd.xlane.f32.xlu0 %v1817
    %v1875 = vpop.xlane.xlu0 %1874
    %1876 = vadd.xlane.f32.xlu0 %v1822
    %v1877 = vpop.xlane.xlu0 %1876
    %1878 = vadd.xlane.f32.xlu0 %v1825
    %v1879 = vpop.xlane.xlu0 %1878
    %1880 = vadd.xlane.f32.xlu0 %v1830
    %v1881 = vpop.xlane.xlu0 %1880
    %1882 = vadd.xlane.f32.xlu0 %v1833
    %v1883 = vpop.xlane.xlu0 %1882
    %v1884 = vmul.f32 %v1742, %v1742
    %v1885 = vmul.f32 %v1745, %v1745
    %v1886 = vmul.f32 %v1750, %v1750
    %v1887 = vmul.f32 %v1753, %v1753
    %v1888 = vmul.f32 %v1758, %v1758
    %v1889 = vmul.f32 %v1761, %v1761
    %v1890 = vmul.f32 %v1766, %v1766
    %v1891 = vmul.f32 %v1769, %v1769
    %v1892 = vmul.f32 %v1774, %v1774
    %v1893 = vmul.f32 %v1777, %v1777
    %v1894 = vmul.f32 %v1782, %v1782
    %v1895 = vmul.f32 %v1785, %v1785
    %v1896 = vmul.f32 %v1790, %v1790
    %v1897 = vmul.f32 %v1793, %v1793
    %v1898 = vmul.f32 %v1798, %v1798
    %v1899 = vmul.f32 %v1801, %v1801
    %v1900 = vmul.f32 %v1806, %v1806
    %v1901 = vmul.f32 %v1809, %v1809
    %v1902 = vmul.f32 %v1814, %v1814
    %v1903 = vmul.f32 %v1817, %v1817
    %v1904 = vmul.f32 %v1822, %v1822
    %v1905 = vmul.f32 %v1825, %v1825
    %v1906 = vmul.f32 %v1830, %v1830
    %v1907 = vmul.f32 %v1833, %v1833
    %1908 = vadd.xlane.f32.xlu0 %v1884
    %v1909 = vpop.xlane.xlu0 %1908
    %1910 = vadd.xlane.f32.xlu0 %v1885
    %v1911 = vpop.xlane.xlu0 %1910
    %1912 = vadd.xlane.f32.xlu0 %v1886
    %v1913 = vpop.xlane.xlu0 %1912
    %1914 = vadd.xlane.f32.xlu0 %v1887
    %v1915 = vpop.xlane.xlu0 %1914
    %1916 = vadd.xlane.f32.xlu0 %v1888
    %v1917 = vpop.xlane.xlu0 %1916
    %1918 = vadd.xlane.f32.xlu0 %v1889
    %v1919 = vpop.xlane.xlu0 %1918
    %1920 = vadd.xlane.f32.xlu0 %v1890
    %v1921 = vpop.xlane.xlu0 %1920
    %1922 = vadd.xlane.f32.xlu0 %v1891
    %v1923 = vpop.xlane.xlu0 %1922
    %1924 = vadd.xlane.f32.xlu0 %v1892
    %v1925 = vpop.xlane.xlu0 %1924
    %1926 = vadd.xlane.f32.xlu0 %v1893
    %v1927 = vpop.xlane.xlu0 %1926
    %1928 = vadd.xlane.f32.xlu0 %v1894
    %v1929 = vpop.xlane.xlu0 %1928
    %1930 = vadd.xlane.f32.xlu0 %v1895
    %v1931 = vpop.xlane.xlu0 %1930
    %1932 = vadd.xlane.f32.xlu0 %v1896
    %v1933 = vpop.xlane.xlu0 %1932
    %1934 = vadd.xlane.f32.xlu0 %v1897
    %v1935 = vpop.xlane.xlu0 %1934
    %1936 = vadd.xlane.f32.xlu0 %v1898
    %v1937 = vpop.xlane.xlu0 %1936
    %1938 = vadd.xlane.f32.xlu0 %v1899
    %v1939 = vpop.xlane.xlu0 %1938
    %1940 = vadd.xlane.f32.xlu0 %v1900
    %v1941 = vpop.xlane.xlu0 %1940
    %1942 = vadd.xlane.f32.xlu0 %v1901
    %v1943 = vpop.xlane.xlu0 %1942
    %1944 = vadd.xlane.f32.xlu0 %v1902
    %v1945 = vpop.xlane.xlu0 %1944
    %1946 = vadd.xlane.f32.xlu0 %v1903
    %v1947 = vpop.xlane.xlu0 %1946
    %1948 = vadd.xlane.f32.xlu0 %v1904
    %v1949 = vpop.xlane.xlu0 %1948
    %1950 = vadd.xlane.f32.xlu0 %v1905
    %v1951 = vpop.xlane.xlu0 %1950
    %1952 = vadd.xlane.f32.xlu0 %v1906
    %v1953 = vpop.xlane.xlu0 %1952
    %1954 = vadd.xlane.f32.xlu0 %v1907
    %v1955 = vpop.xlane.xlu0 %1954
    %v1956 = vmul.f32 %v1837, 0.0078125
    %v1957 = vmul.f32 %v1839, 0.0078125
    %v1958 = vmul.f32 %v1841, 0.0078125
    %v1959 = vmul.f32 %v1843, 0.0078125
    %v1960 = vmul.f32 %v1845, 0.0078125
    %v1961 = vmul.f32 %v1847, 0.0078125
    %v1962 = vmul.f32 %v1849, 0.0078125
    %v1963 = vmul.f32 %v1851, 0.0078125
    %v1964 = vmul.f32 %v1853, 0.0078125
    %v1965 = vmul.f32 %v1855, 0.0078125
    %v1966 = vmul.f32 %v1857, 0.0078125
    %v1967 = vmul.f32 %v1859, 0.0078125
    %v1968 = vmul.f32 %v1861, 0.0078125
    %v1969 = vmul.f32 %v1863, 0.0078125
    %v1970 = vmul.f32 %v1865, 0.0078125
    %v1971 = vmul.f32 %v1867, 0.0078125
    %v1972 = vmul.f32 %v1869, 0.0078125
    %v1973 = vmul.f32 %v1871, 0.0078125
    %v1974 = vmul.f32 %v1873, 0.0078125
    %v1975 = vmul.f32 %v1875, 0.0078125
    %v1976 = vmul.f32 %v1877, 0.0078125
    %v1977 = vmul.f32 %v1879, 0.0078125
    %v1978 = vmul.f32 %v1881, 0.0078125
    %v1979 = vmul.f32 %v1883, 0.0078125
    %v1980 = vmul.f32 %v1909, 0.0078125
    %v1981 = vmul.f32 %v1911, 0.0078125
    %v1982 = vmul.f32 %v1913, 0.0078125
    %v1983 = vmul.f32 %v1915, 0.0078125
    %v1984 = vmul.f32 %v1917, 0.0078125
    %v1985 = vmul.f32 %v1919, 0.0078125
    %v1986 = vmul.f32 %v1921, 0.0078125
    %v1987 = vmul.f32 %v1923, 0.0078125
    %v1988 = vmul.f32 %v1925, 0.0078125
    %v1989 = vmul.f32 %v1927, 0.0078125
    %v1990 = vmul.f32 %v1929, 0.0078125
    %v1991 = vmul.f32 %v1931, 0.0078125
    %v1992 = vmul.f32 %v1933, 0.0078125
    %v1993 = vmul.f32 %v1935, 0.0078125
    %v1994 = vmul.f32 %v1937, 0.0078125
    %v1995 = vmul.f32 %v1939, 0.0078125
    %v1996 = vmul.f32 %v1941, 0.0078125
    %v1997 = vmul.f32 %v1943, 0.0078125
    %v1998 = vmul.f32 %v1945, 0.0078125
    %v1999 = vmul.f32 %v1947, 0.0078125
    %v2000 = vmul.f32 %v1949, 0.0078125
    %v2001 = vmul.f32 %v1951, 0.0078125
    %v2002 = vmul.f32 %v1953, 0.0078125
    %v2003 = vmul.f32 %v1955, 0.0078125
    %v2004 = vmul.f32 %v1956, %v1956
    %v2005 = vmul.f32 %v1957, %v1957
    %v2006 = vmul.f32 %v1958, %v1958
    %v2007 = vmul.f32 %v1959, %v1959
    %v2008 = vmul.f32 %v1960, %v1960
    %v2009 = vmul.f32 %v1961, %v1961
    %v2010 = vmul.f32 %v1962, %v1962
    %v2011 = vmul.f32 %v1963, %v1963
    %v2012 = vmul.f32 %v1964, %v1964
    %v2013 = vmul.f32 %v1965, %v1965
    %v2014 = vmul.f32 %v1966, %v1966
    %v2015 = vmul.f32 %v1967, %v1967
    %v2016 = vmul.f32 %v1968, %v1968
    %v2017 = vmul.f32 %v1969, %v1969
    %v2018 = vmul.f32 %v1970, %v1970
    %v2019 = vmul.f32 %v1971, %v1971
    %v2020 = vmul.f32 %v1972, %v1972
    %v2021 = vmul.f32 %v1973, %v1973
    %v2022 = vmul.f32 %v1974, %v1974
    %v2023 = vmul.f32 %v1975, %v1975
    %v2024 = vmul.f32 %v1976, %v1976
    %v2025 = vmul.f32 %v1977, %v1977
    %v2026 = vmul.f32 %v1978, %v1978
    %v2027 = vmul.f32 %v1979, %v1979
    %v2028 = vsub.f32 %v1980, %v2004
    %v2029 = vsub.f32 %v1981, %v2005
    %v2030 = vsub.f32 %v1982, %v2006
    %v2031 = vsub.f32 %v1983, %v2007
    %v2032 = vsub.f32 %v1984, %v2008
    %v2033 = vsub.f32 %v1985, %v2009
    %v2034 = vsub.f32 %v1986, %v2010
    %v2035 = vsub.f32 %v1987, %v2011
    %v2036 = vsub.f32 %v1988, %v2012
    %v2037 = vsub.f32 %v1989, %v2013
    %v2038 = vsub.f32 %v1990, %v2014
    %v2039 = vsub.f32 %v1991, %v2015
    %v2040 = vsub.f32 %v1992, %v2016
    %v2041 = vsub.f32 %v1993, %v2017
    %v2042 = vsub.f32 %v1994, %v2018
    %v2043 = vsub.f32 %v1995, %v2019
    %v2044 = vsub.f32 %v1996, %v2020
    %v2045 = vsub.f32 %v1997, %v2021
    %v2046 = vsub.f32 %v1998, %v2022
    %v2047 = vsub.f32 %v1999, %v2023
    %v2048 = vsub.f32 %v2000, %v2024
    %v2049 = vsub.f32 %v2001, %v2025
    %v2050 = vsub.f32 %v2002, %v2026
    %v2051 = vsub.f32 %v2003, %v2027
    %v2052 = vsub.f32 %v1742, %v1956
    %v2053 = vsub.f32 %v1745, %v1957
    %v2054 = vsub.f32 %v1750, %v1958
    %v2055 = vsub.f32 %v1753, %v1959
    %v2056 = vsub.f32 %v1758, %v1960
    %v2057 = vsub.f32 %v1761, %v1961
    %v2058 = vsub.f32 %v1766, %v1962
    %v2059 = vsub.f32 %v1769, %v1963
    %v2060 = vsub.f32 %v1774, %v1964
    %v2061 = vsub.f32 %v1777, %v1965
    %v2062 = vsub.f32 %v1782, %v1966
    %v2063 = vsub.f32 %v1785, %v1967
    %v2064 = vsub.f32 %v1790, %v1968
    %v2065 = vsub.f32 %v1793, %v1969
    %v2066 = vsub.f32 %v1798, %v1970
    %v2067 = vsub.f32 %v1801, %v1971
    %v2068 = vsub.f32 %v1806, %v1972
    %v2069 = vsub.f32 %v1809, %v1973
    %v2070 = vsub.f32 %v1814, %v1974
    %v2071 = vsub.f32 %v1817, %v1975
    %v2072 = vsub.f32 %v1822, %v1976
    %v2073 = vsub.f32 %v1825, %v1977
    %v2074 = vsub.f32 %v1830, %v1978
    %v2075 = vsub.f32 %v1833, %v1979
    %v2076 = vadd.f32 %v2028, 1e-05
    %v2077 = vadd.f32 %v2029, 1e-05
    %v2078 = vadd.f32 %v2030, 1e-05
    %v2079 = vadd.f32 %v2031, 1e-05
    %v2080 = vadd.f32 %v2032, 1e-05
    %v2081 = vadd.f32 %v2033, 1e-05
    %v2082 = vadd.f32 %v2034, 1e-05
    %v2083 = vadd.f32 %v2035, 1e-05
    %v2084 = vadd.f32 %v2036, 1e-05
    %v2085 = vadd.f32 %v2037, 1e-05
    %v2086 = vadd.f32 %v2038, 1e-05
    %v2087 = vadd.f32 %v2039, 1e-05
    %v2088 = vadd.f32 %v2040, 1e-05
    %v2089 = vadd.f32 %v2041, 1e-05
    %v2090 = vadd.f32 %v2042, 1e-05
    %v2091 = vadd.f32 %v2043, 1e-05
    %v2092 = vadd.f32 %v2044, 1e-05
    %v2093 = vadd.f32 %v2045, 1e-05
    %v2094 = vadd.f32 %v2046, 1e-05
    %v2095 = vadd.f32 %v2047, 1e-05
    %v2096 = vadd.f32 %v2048, 1e-05
    %v2097 = vadd.f32 %v2049, 1e-05
    %v2098 = vadd.f32 %v2050, 1e-05
    %v2099 = vadd.f32 %v2051, 1e-05
    %v2100 = vrsqrt.pop %v2076
    %v2101 = vrsqrt.pop %v2077
    %v2102 = vrsqrt.pop %v2078
    %v2103 = vrsqrt.pop %v2079
    %v2104 = vrsqrt.pop %v2080
    %v2105 = vrsqrt.pop %v2081
    %v2106 = vrsqrt.pop %v2082
    %v2107 = vrsqrt.pop %v2083
    %v2108 = vrsqrt.pop %v2084
    %v2109 = vrsqrt.pop %v2085
    %v2110 = vrsqrt.pop %v2086
    %v2111 = vrsqrt.pop %v2087
    %v2112 = vrsqrt.pop %v2088
    %v2113 = vrsqrt.pop %v2089
    %v2114 = vrsqrt.pop %v2090
    %v2115 = vrsqrt.pop %v2091
    %v2116 = vrsqrt.pop %v2092
    %v2117 = vrsqrt.pop %v2093
    %v2118 = vrsqrt.pop %v2094
    %v2119 = vrsqrt.pop %v2095
    %v2120 = vrsqrt.pop %v2096
    %v2121 = vrsqrt.pop %v2097
    %v2122 = vrsqrt.pop %v2098
    %v2123 = vrsqrt.pop %v2099
    %v2124 = vmul.f32 %v2052, %v2100
    %v2125 = vmul.f32 %v2053, %v2101
    %v2126 = vmul.f32 %v2054, %v2102
    %v2127 = vmul.f32 %v2055, %v2103
    %v2128 = vmul.f32 %v2056, %v2104
    %v2129 = vmul.f32 %v2057, %v2105
    %v2130 = vmul.f32 %v2058, %v2106
    %v2131 = vmul.f32 %v2059, %v2107
    %v2132 = vmul.f32 %v2060, %v2108
    %v2133 = vmul.f32 %v2061, %v2109
    %v2134 = vmul.f32 %v2062, %v2110
    %v2135 = vmul.f32 %v2063, %v2111
    %v2136 = vmul.f32 %v2064, %v2112
    %v2137 = vmul.f32 %v2065, %v2113
    %v2138 = vmul.f32 %v2066, %v2114
    %v2139 = vmul.f32 %v2067, %v2115
    %v2140 = vmul.f32 %v2068, %v2116
    %v2141 = vmul.f32 %v2069, %v2117
    %v2142 = vmul.f32 %v2070, %v2118
    %v2143 = vmul.f32 %v2071, %v2119
    %v2144 = vmul.f32 %v2072, %v2120
    %v2145 = vmul.f32 %v2073, %v2121
    %v2146 = vmul.f32 %v2074, %v2122
    %v2147 = vmul.f32 %v2075, %v2123
    %s2148 = scalar_lea.vmem %s6, 1
    %v2149 = vld [vmem:[%s2148] sm:$0x1]
    %v2151 = vlaneseq
    %v2152 = vshrl.u32 %v2151, 7
    %v2153 = vsub.s32 0, %v2152
    %v2154 = vrot.slane %v2149, %v2153
    %v2156 = vmul.f32 %v2124, %v2154
    %v2157 = vmul.f32 %v2125, %v2154
    %v2158 = vmul.f32 %v2126, %v2154
    %v2159 = vmul.f32 %v2127, %v2154
    %v2160 = vmul.f32 %v2128, %v2154
    %v2161 = vmul.f32 %v2129, %v2154
    %v2162 = vmul.f32 %v2130, %v2154
    %v2163 = vmul.f32 %v2131, %v2154
    %v2164 = vmul.f32 %v2132, %v2154
    %v2165 = vmul.f32 %v2133, %v2154
    %v2166 = vmul.f32 %v2134, %v2154
    %v2167 = vmul.f32 %v2135, %v2154
    %v2168 = vmul.f32 %v2136, %v2154
    %v2169 = vmul.f32 %v2137, %v2154
    %v2170 = vmul.f32 %v2138, %v2154
    %v2171 = vmul.f32 %v2139, %v2154
    %v2172 = vmul.f32 %v2140, %v2154
    %v2173 = vmul.f32 %v2141, %v2154
    %v2174 = vmul.f32 %v2142, %v2154
    %v2175 = vmul.f32 %v2143, %v2154
    %v2176 = vmul.f32 %v2144, %v2154
    %v2177 = vmul.f32 %v2145, %v2154
    %v2178 = vmul.f32 %v2146, %v2154
    %v2179 = vmul.f32 %v2147, %v2154
    %s2180 = scalar_lea.vmem %s7, 1
    %v2181 = vld [vmem:[%s2180] sm:$0x1]
    %v2183 = vlaneseq
    %v2184 = vshrl.u32 %v2183, 7
    %v2185 = vsub.s32 0, %v2184
    %v2186 = vrot.slane %v2181, %v2185
    %v2188 = vadd.f32 %v2156, %v2186
    %v2189 = vadd.f32 %v2157, %v2186
    %v2190 = vadd.f32 %v2158, %v2186
    %v2191 = vadd.f32 %v2159, %v2186
    %v2192 = vadd.f32 %v2160, %v2186
    %v2193 = vadd.f32 %v2161, %v2186
    %v2194 = vadd.f32 %v2162, %v2186
    %v2195 = vadd.f32 %v2163, %v2186
    %v2196 = vadd.f32 %v2164, %v2186
    %v2197 = vadd.f32 %v2165, %v2186
    %v2198 = vadd.f32 %v2166, %v2186
    %v2199 = vadd.f32 %v2167, %v2186
    %v2200 = vadd.f32 %v2168, %v2186
    %v2201 = vadd.f32 %v2169, %v2186
    %v2202 = vadd.f32 %v2170, %v2186
    %v2203 = vadd.f32 %v2171, %v2186
    %v2204 = vadd.f32 %v2172, %v2186
    %v2205 = vadd.f32 %v2173, %v2186
    %v2206 = vadd.f32 %v2174, %v2186
    %v2207 = vadd.f32 %v2175, %v2186
    %v2208 = vadd.f32 %v2176, %v2186
    %v2209 = vadd.f32 %v2177, %v2186
    %v2210 = vadd.f32 %v2178, %v2186
    %v2211 = vadd.f32 %v2179, %v2186
    %v2212 = vxor.u32 %v2188, 2147483648
    %v2213 = vxor.u32 %v2189, 2147483648
    %v2214 = vxor.u32 %v2190, 2147483648
    %v2215 = vxor.u32 %v2191, 2147483648
    %v2216 = vxor.u32 %v2192, 2147483648
    %v2217 = vxor.u32 %v2193, 2147483648
    %v2218 = vxor.u32 %v2194, 2147483648
    %v2219 = vxor.u32 %v2195, 2147483648
    %v2220 = vxor.u32 %v2196, 2147483648
    %v2221 = vxor.u32 %v2197, 2147483648
    %v2222 = vxor.u32 %v2198, 2147483648
    %v2223 = vxor.u32 %v2199, 2147483648
    %v2224 = vxor.u32 %v2200, 2147483648
    %v2225 = vxor.u32 %v2201, 2147483648
    %v2226 = vxor.u32 %v2202, 2147483648
    %v2227 = vxor.u32 %v2203, 2147483648
    %v2228 = vxor.u32 %v2204, 2147483648
    %v2229 = vxor.u32 %v2205, 2147483648
    %v2230 = vxor.u32 %v2206, 2147483648
    %v2231 = vxor.u32 %v2207, 2147483648
    %v2232 = vxor.u32 %v2208, 2147483648
    %v2233 = vxor.u32 %v2209, 2147483648
    %v2234 = vxor.u32 %v2210, 2147483648
    %v2235 = vxor.u32 %v2211, 2147483648
    %v2236 = vmul.f32 %v2212, 1.442695
    %v2237 = vpow.pop %v2236
    %v2238 = vmul.f32 %v2213, 1.442695
    %v2239 = vpow.pop %v2238
    %v2240 = vmul.f32 %v2214, 1.442695
    %v2241 = vpow.pop %v2240
    %v2242 = vmul.f32 %v2215, 1.442695
    %v2243 = vpow.pop %v2242
    %v2244 = vmul.f32 %v2216, 1.442695
    %v2245 = vpow.pop %v2244
    %v2246 = vmul.f32 %v2217, 1.442695
    %v2247 = vpow.pop %v2246
    %v2248 = vmul.f32 %v2218, 1.442695
    %v2249 = vpow.pop %v2248
    %v2250 = vmul.f32 %v2219, 1.442695
    %v2251 = vpow.pop %v2250
    %v2252 = vmul.f32 %v2220, 1.442695
    %v2253 = vpow.pop %v2252
    %v2254 = vmul.f32 %v2221, 1.442695
    %v2255 = vpow.pop %v2254
    %v2256 = vmul.f32 %v2222, 1.442695
    %v2257 = vpow.pop %v2256
    %v2258 = vmul.f32 %v2223, 1.442695
    %v2259 = vpow.pop %v2258
    %v2260 = vmul.f32 %v2224, 1.442695
    %v2261 = vpow.pop %v2260
    %v2262 = vmul.f32 %v2225, 1.442695
    %v2263 = vpow.pop %v2262
    %v2264 = vmul.f32 %v2226, 1.442695
    %v2265 = vpow.pop %v2264
    %v2266 = vmul.f32 %v2227, 1.442695
    %v2267 = vpow.pop %v2266
    %v2268 = vmul.f32 %v2228, 1.442695
    %v2269 = vpow.pop %v2268
    %v2270 = vmul.f32 %v2229, 1.442695
    %v2271 = vpow.pop %v2270
    %v2272 = vmul.f32 %v2230, 1.442695
    %v2273 = vpow.pop %v2272
    %v2274 = vmul.f32 %v2231, 1.442695
    %v2275 = vpow.pop %v2274
    %v2276 = vmul.f32 %v2232, 1.442695
    %v2277 = vpow.pop %v2276
    %v2278 = vmul.f32 %v2233, 1.442695
    %v2279 = vpow.pop %v2278
    %v2280 = vmul.f32 %v2234, 1.442695
    %v2281 = vpow.pop %v2280
    %v2282 = vmul.f32 %v2235, 1.442695
    %v2283 = vpow.pop %v2282
    %v2284 = vadd.f32 %v2237, 1.0
    %v2285 = vadd.f32 %v2239, 1.0
    %v2286 = vadd.f32 %v2241, 1.0
    %v2287 = vadd.f32 %v2243, 1.0
    %v2288 = vadd.f32 %v2245, 1.0
    %v2289 = vadd.f32 %v2247, 1.0
    %v2290 = vadd.f32 %v2249, 1.0
    %v2291 = vadd.f32 %v2251, 1.0
    %v2292 = vadd.f32 %v2253, 1.0
    %v2293 = vadd.f32 %v2255, 1.0
    %v2294 = vadd.f32 %v2257, 1.0
    %v2295 = vadd.f32 %v2259, 1.0
    %v2296 = vadd.f32 %v2261, 1.0
    %v2297 = vadd.f32 %v2263, 1.0
    %v2298 = vadd.f32 %v2265, 1.0
    %v2299 = vadd.f32 %v2267, 1.0
    %v2300 = vadd.f32 %v2269, 1.0
    %v2301 = vadd.f32 %v2271, 1.0
    %v2302 = vadd.f32 %v2273, 1.0
    %v2303 = vadd.f32 %v2275, 1.0
    %v2304 = vadd.f32 %v2277, 1.0
    %v2305 = vadd.f32 %v2279, 1.0
    %v2306 = vadd.f32 %v2281, 1.0
    %v2307 = vadd.f32 %v2283, 1.0
    %v2308 = vrcp.pop %v2284
    %v2309 = vmul.f32 1.0, %v2308
    %v2310 = vrcp.pop %v2285
    %v2311 = vmul.f32 1.0, %v2310
    %v2312 = vrcp.pop %v2286
    %v2313 = vmul.f32 1.0, %v2312
    %v2314 = vrcp.pop %v2287
    %v2315 = vmul.f32 1.0, %v2314
    %v2316 = vrcp.pop %v2288
    %v2317 = vmul.f32 1.0, %v2316
    %v2318 = vrcp.pop %v2289
    %v2319 = vmul.f32 1.0, %v2318
    %v2320 = vrcp.pop %v2290
    %v2321 = vmul.f32 1.0, %v2320
    %v2322 = vrcp.pop %v2291
    %v2323 = vmul.f32 1.0, %v2322
    %v2324 = vrcp.pop %v2292
    %v2325 = vmul.f32 1.0, %v2324
    %v2326 = vrcp.pop %v2293
    %v2327 = vmul.f32 1.0, %v2326
    %v2328 = vrcp.pop %v2294
    %v2329 = vmul.f32 1.0, %v2328
    %v2330 = vrcp.pop %v2295
    %v2331 = vmul.f32 1.0, %v2330
    %v2332 = vrcp.pop %v2296
    %v2333 = vmul.f32 1.0, %v2332
    %v2334 = vrcp.pop %v2297
    %v2335 = vmul.f32 1.0, %v2334
    %v2336 = vrcp.pop %v2298
    %v2337 = vmul.f32 1.0, %v2336
    %v2338 = vrcp.pop %v2299
    %v2339 = vmul.f32 1.0, %v2338
    %v2340 = vrcp.pop %v2300
    %v2341 = vmul.f32 1.0, %v2340
    %v2342 = vrcp.pop %v2301
    %v2343 = vmul.f32 1.0, %v2342
    %v2344 = vrcp.pop %v2302
    %v2345 = vmul.f32 1.0, %v2344
    %v2346 = vrcp.pop %v2303
    %v2347 = vmul.f32 1.0, %v2346
    %v2348 = vrcp.pop %v2304
    %v2349 = vmul.f32 1.0, %v2348
    %v2350 = vrcp.pop %v2305
    %v2351 = vmul.f32 1.0, %v2350
    %v2352 = vrcp.pop %v2306
    %v2353 = vmul.f32 1.0, %v2352
    %v2354 = vrcp.pop %v2307
    %v2355 = vmul.f32 1.0, %v2354
    %v2356 = vmul.f32 %v2188, %v2309
    %v2357 = vmul.f32 %v2189, %v2311
    %v2358 = vmul.f32 %v2190, %v2313
    %v2359 = vmul.f32 %v2191, %v2315
    %v2360 = vmul.f32 %v2192, %v2317
    %v2361 = vmul.f32 %v2193, %v2319
    %v2362 = vmul.f32 %v2194, %v2321
    %v2363 = vmul.f32 %v2195, %v2323
    %v2364 = vmul.f32 %v2196, %v2325
    %v2365 = vmul.f32 %v2197, %v2327
    %v2366 = vmul.f32 %v2198, %v2329
    %v2367 = vmul.f32 %v2199, %v2331
    %v2368 = vmul.f32 %v2200, %v2333
    %v2369 = vmul.f32 %v2201, %v2335
    %v2370 = vmul.f32 %v2202, %v2337
    %v2371 = vmul.f32 %v2203, %v2339
    %v2372 = vmul.f32 %v2204, %v2341
    %v2373 = vmul.f32 %v2205, %v2343
    %v2374 = vmul.f32 %v2206, %v2345
    %v2375 = vmul.f32 %v2207, %v2347
    %v2376 = vmul.f32 %v2208, %v2349
    %v2377 = vmul.f32 %v2209, %v2351
    %v2378 = vmul.f32 %v2210, %v2353
    %v2379 = vmul.f32 %v2211, %v2355
    %v2380 = vpack.c.bf16 %v2357, %v2356
    %v2381 = vpack.c.bf16 %v2359, %v2358
    %v2382 = vpack.c.bf16 %v2361, %v2360
    %v2383 = vpack.c.bf16 %v2363, %v2362
    %v2384 = vpack.c.bf16 %v2365, %v2364
    %v2385 = vpack.c.bf16 %v2367, %v2366
    %v2386 = vpack.c.bf16 %v2369, %v2368
    %v2387 = vpack.c.bf16 %v2371, %v2370
    %v2388 = vpack.c.bf16 %v2373, %v2372
    %v2389 = vpack.c.bf16 %v2375, %v2374
    %v2390 = vpack.c.bf16 %v2377, %v2376
    %v2391 = vpack.c.bf16 %v2379, %v2378
    %v2392 = vld [vmem:[%s8] sm:$0xf]
    %v2393 = vld [vmem:[%s8 + $0x4] sm:$0xf]
    %v2394 = vld [vmem:[%s8 + $0x8] sm:$0xf]
    %v2395 = vld [vmem:[%s8 + $0xc] sm:$0xf]
    %v2396 = vld [vmem:[%s8 + $0x10] sm:$0xf]
    %v2397 = vld [vmem:[%s8 + $0x14] sm:$0xf]
    %v2398 = vld [vmem:[%s8 + $0x18] sm:$0xf]
    %v2399 = vld [vmem:[%s8 + $0x1c] sm:$0xf]
    %v2400 = vld [vmem:[%s8 + $0x20] sm:$0xf]
    %v2401 = vld [vmem:[%s8 + $0x24] sm:$0xf]
    %v2402 = vld [vmem:[%s8 + $0x28] sm:$0xf]
    %v2403 = vld [vmem:[%s8 + $0x2c] sm:$0xf]
    %v2404 = vld [vmem:[%s8 + $0x30] sm:$0xf]
    %v2405 = vld [vmem:[%s8 + $0x34] sm:$0xf]
    %v2406 = vld [vmem:[%s8 + $0x38] sm:$0xf]
    %v2407 = vld [vmem:[%s8 + $0x3c] sm:$0xf]
    %v2408 = vld [vmem:[%s9] sm:$0x1]
    %v2410 = vlaneseq
    %v2411 = vshrl.u32 %v2410, 7
    %v2412 = vsub.s32 0, %v2411
    %v2413 = vrot.slane %v2408, %v2412
    %v2431 = vunpack.c.l.b16 %v2392
    %v2432 = vunpack.c.l.b16 %v2393
    %v2433 = vunpack.c.l.b16 %v2394
    %v2434 = vunpack.c.l.b16 %v2395
    %v2435 = vunpack.c.l.b16 %v2396
    %v2436 = vunpack.c.l.b16 %v2397
    %v2437 = vunpack.c.l.b16 %v2398
    %v2438 = vunpack.c.l.b16 %v2399
    %v2439 = vunpack.c.l.b16 %v2400
    %v2440 = vunpack.c.l.b16 %v2401
    %v2441 = vunpack.c.l.b16 %v2402
    %v2442 = vunpack.c.l.b16 %v2403
    %v2443 = vunpack.c.l.b16 %v2404
    %v2444 = vunpack.c.l.b16 %v2405
    %v2445 = vunpack.c.l.b16 %v2406
    %v2446 = vunpack.c.l.b16 %v2407
    %v2447 = vpack.c.b16 %v2432, %v2431
    %v2448 = vpack.c.b16 %v2434, %v2433
    %v2449 = vpack.c.b16 %v2436, %v2435
    %v2450 = vpack.c.b16 %v2438, %v2437
    %v2451 = vpack.c.b16 %v2440, %v2439
    %v2452 = vpack.c.b16 %v2442, %v2441
    %v2453 = vpack.c.b16 %v2444, %v2443
    %v2454 = vpack.c.b16 %v2446, %v2445
    %2463 = vmatprep.subr.bf16.mxu0 0
    %2464 = vmatpush1.bf16.msra.mxu0 %v2447
    %2465 = vmatprep.subr.bf16.mxu0 0
    %2466 = vmatpush1.bf16.msra.mxu0 %v2448
    %2467 = vmatprep.subr.bf16.mxu0 0
    %2468 = vmatpush1.bf16.msra.mxu0 %v2449
    %2469 = vmatprep.subr.bf16.mxu0 0
    %2470 = vmatpush1.bf16.msra.mxu0 %v2450
    %2471 = vmatprep.subr.bf16.mxu0 0
    %2472 = vmatpush1.bf16.msra.mxu0 %v2451
    %2473 = vmatprep.subr.bf16.mxu0 0
    %2474 = vmatpush1.bf16.msra.mxu0 %v2452
    %2475 = vmatprep.subr.bf16.mxu0 0
    %2476 = vmatpush1.bf16.msra.mxu0 %v2453
    %2477 = vmatprep.subr.bf16.mxu0 0
    %2478 = vmatpush1.bf16.msra.mxu0 %v2454
    %2479 = vmatprep.subr.bf16.mxu0 0
    %2480 = vmatpush1.bf16.msra.mxu0 0
    %2481 = vmatprep.subr.bf16.mxu0 0
    %2482 = vmatpush1.bf16.msra.mxu0 0
    %2483 = vmatprep.subr.bf16.mxu0 0
    %2484 = vmatpush1.bf16.msra.mxu0 0
    %2485 = vmatprep.subr.bf16.mxu0 0
    %2486 = vmatpush1.bf16.msra.mxu0 0
    %2487 = vmatprep.subr.bf16.mxu0 0
    %2488 = vmatpush1.bf16.msra.mxu0 0
    %2489 = vmatprep.subr.bf16.mxu0 0
    %2490 = vmatpush1.bf16.msra.mxu0 0
    %2491 = vmatprep.subr.bf16.mxu0 0
    %2492 = vmatpush1.bf16.msra.mxu0 0
    %2493 = vmatprep.subr.bf16.mxu0 0
    %2494 = vmatpush1.bf16.msra.mxu0 0
    %2495 = vmatprep.mubr.bf16.mxu0 0
    %2496 = vmatmul.mubr.bf16.gmra.mrb[0].mxu0 %v2380
    %v2497 = vpop.f32.mrb[0].mxu0
    %v2498 = vadd.f32 %v2413, %v2497
    %v2499 = vpop.f32.mrb[0].mxu0
    %v2500 = vpop.f32.mrb[0].mxu0
    %v2501 = vadd.f32 %v2413, %v2500
    %v2502 = vpop.f32.mrb[0].mxu0
    %2503 = vmatprep.mubr.bf16.mxu0 0
    %2504 = vmatmul.mubr.bf16.gmra.mrb[0].mxu0 %v2381
    %v2505 = vpop.f32.mrb[0].mxu0
    %v2506 = vadd.f32 %v2413, %v2505
    %v2507 = vpop.f32.mrb[0].mxu0
    %v2508 = vpop.f32.mrb[0].mxu0
    %v2509 = vadd.f32 %v2413, %v2508
    %v2510 = vpop.f32.mrb[0].mxu0
    %2511 = vmatprep.mubr.bf16.mxu0 0
    %2512 = vmatmul.mubr.bf16.gmra.mrb[0].mxu0 %v2382
    %v2513 = vpop.f32.mrb[0].mxu0
    %v2514 = vadd.f32 %v2413, %v2513
    %v2515 = vpop.f32.mrb[0].mxu0
    %v2516 = vpop.f32.mrb[0].mxu0
    %v2517 = vadd.f32 %v2413, %v2516
    %v2518 = vpop.f32.mrb[0].mxu0
    %2519 = vmatprep.mubr.bf16.mxu0 0
    %2520 = vmatmul.mubr.bf16.gmra.mrb[0].mxu0 %v2383
    %v2521 = vpop.f32.mrb[0].mxu0
    %v2522 = vadd.f32 %v2413, %v2521
    %v2523 = vpop.f32.mrb[0].mxu0
    %v2524 = vpop.f32.mrb[0].mxu0
    %v2525 = vadd.f32 %v2413, %v2524
    %v2526 = vpop.f32.mrb[0].mxu0
    %2527 = vmatprep.mubr.bf16.mxu0 0
    %2528 = vmatmul.mubr.bf16.gmra.mrb[0].mxu0 %v2384
    %v2529 = vpop.f32.mrb[0].mxu0
    %v2530 = vadd.f32 %v2413, %v2529
    %v2531 = vpop.f32.mrb[0].mxu0
    %v2532 = vpop.f32.mrb[0].mxu0
    %v2533 = vadd.f32 %v2413, %v2532
    %v2534 = vpop.f32.mrb[0].mxu0
    %2535 = vmatprep.mubr.bf16.mxu0 0
    %2536 = vmatmul.mubr.bf16.gmra.mrb[0].mxu0 %v2385
    %v2537 = vpop.f32.mrb[0].mxu0
    %v2538 = vadd.f32 %v2413, %v2537
    %v2539 = vpop.f32.mrb[0].mxu0
    %v2540 = vpop.f32.mrb[0].mxu0
    %v2541 = vadd.f32 %v2413, %v2540
    %v2542 = vpop.f32.mrb[0].mxu0
    %2543 = vmatprep.mubr.bf16.mxu0 0
    %2544 = vmatmul.mubr.bf16.gmra.mrb[0].mxu0 %v2386
    %v2545 = vpop.f32.mrb[0].mxu0
    %v2546 = vadd.f32 %v2413, %v2545
    %v2547 = vpop.f32.mrb[0].mxu0
    %v2548 = vpop.f32.mrb[0].mxu0
    %v2549 = vadd.f32 %v2413, %v2548
    %v2550 = vpop.f32.mrb[0].mxu0
    %2551 = vmatprep.mubr.bf16.mxu0 0
    %2552 = vmatmul.mubr.bf16.gmra.mrb[0].mxu0 %v2387
    %v2553 = vpop.f32.mrb[0].mxu0
    %v2554 = vadd.f32 %v2413, %v2553
    %v2555 = vpop.f32.mrb[0].mxu0
    %v2556 = vpop.f32.mrb[0].mxu0
    %v2557 = vadd.f32 %v2413, %v2556
    %v2558 = vpop.f32.mrb[0].mxu0
    %2559 = vmatprep.mubr.bf16.mxu0 0
    %2560 = vmatmul.mubr.bf16.gmra.mrb[0].mxu0 %v2388
    %v2561 = vpop.f32.mrb[0].mxu0
    %v2562 = vadd.f32 %v2413, %v2561
    %v2563 = vpop.f32.mrb[0].mxu0
    %v2564 = vpop.f32.mrb[0].mxu0
    %v2565 = vadd.f32 %v2413, %v2564
    %v2566 = vpop.f32.mrb[0].mxu0
    %2567 = vmatprep.mubr.bf16.mxu0 0
    %2568 = vmatmul.mubr.bf16.gmra.mrb[0].mxu0 %v2389
    %v2569 = vpop.f32.mrb[0].mxu0
    %v2570 = vadd.f32 %v2413, %v2569
    %v2571 = vpop.f32.mrb[0].mxu0
    %v2572 = vpop.f32.mrb[0].mxu0
    %v2573 = vadd.f32 %v2413, %v2572
    %v2574 = vpop.f32.mrb[0].mxu0
    %2575 = vmatprep.mubr.bf16.mxu0 0
    %2576 = vmatmul.mubr.bf16.gmra.mrb[0].mxu0 %v2390
    %v2577 = vpop.f32.mrb[0].mxu0
    %v2578 = vadd.f32 %v2413, %v2577
    %v2579 = vpop.f32.mrb[0].mxu0
    %v2580 = vpop.f32.mrb[0].mxu0
    %v2581 = vadd.f32 %v2413, %v2580
    %v2582 = vpop.f32.mrb[0].mxu0
    %2583 = vmatprep.mubr.bf16.mxu0 0
    %2584 = vmatmul.mubr.bf16.gmra.mrb[0].mxu0 %v2391
    %v2585 = vpop.f32.mrb[0].mxu0
    %v2586 = vadd.f32 %v2413, %v2585
    %v2587 = vpop.f32.mrb[0].mxu0
    %v2588 = vpop.f32.mrb[0].mxu0
    %v2589 = vadd.f32 %v2413, %v2588
    %v2590 = vpop.f32.mrb[0].mxu0
    %2591 = vdwg.mxu0
    %vm2592 = vcmask 64512
    %2593 = vst.msk [vmem:[%s11] sm:$0xff] %vm2592, %v2498
    %2594 = vst.msk [vmem:[%s11 + $0x8] sm:$0xff] %vm2592, %v2501
    %2595 = vst.msk [vmem:[%s11 + $0x10] sm:$0xff] %vm2592, %v2506
    %2596 = vst.msk [vmem:[%s11 + $0x18] sm:$0xff] %vm2592, %v2509
    %2597 = vst.msk [vmem:[%s11 + $0x20] sm:$0xff] %vm2592, %v2514
    %2598 = vst.msk [vmem:[%s11 + $0x28] sm:$0xff] %vm2592, %v2517
    %2599 = vst.msk [vmem:[%s11 + $0x30] sm:$0xff] %vm2592, %v2522
    %2600 = vst.msk [vmem:[%s11 + $0x38] sm:$0xff] %vm2592, %v2525
    %2601 = vst.msk [vmem:[%s11 + $0x40] sm:$0xff] %vm2592, %v2530
    %2602 = vst.msk [vmem:[%s11 + $0x48] sm:$0xff] %vm2592, %v2533
    %2603 = vst.msk [vmem:[%s11 + $0x50] sm:$0xff] %vm2592, %v2538
    %2604 = vst.msk [vmem:[%s11 + $0x58] sm:$0xff] %vm2592, %v2541
    %2605 = vst.msk [vmem:[%s11 + $0x60] sm:$0xff] %vm2592, %v2546
    %2606 = vst.msk [vmem:[%s11 + $0x68] sm:$0xff] %vm2592, %v2549
    %2607 = vst.msk [vmem:[%s11 + $0x70] sm:$0xff] %vm2592, %v2554
    %2608 = vst.msk [vmem:[%s11 + $0x78] sm:$0xff] %vm2592, %v2557
    %2609 = vst.msk [vmem:[%s11 + $0x80] sm:$0xff] %vm2592, %v2562
    %2610 = vst.msk [vmem:[%s11 + $0x88] sm:$0xff] %vm2592, %v2565
    %2611 = vst.msk [vmem:[%s11 + $0x90] sm:$0xff] %vm2592, %v2570
    %2612 = vst.msk [vmem:[%s11 + $0x98] sm:$0xff] %vm2592, %v2573
    %2613 = vst.msk [vmem:[%s11 + $0xa0] sm:$0xff] %vm2592, %v2578
    %2614 = vst.msk [vmem:[%s11 + $0xa8] sm:$0xff] %vm2592, %v2581
    %2615 = vst.msk [vmem:[%s11 + $0xb0] sm:$0xff] %vm2592, %v2586
    %2616 = vst.msk [vmem:[%s11 + $0xb8] sm:$0xff] %vm2592, %v2589
    // Predicated region
    $region42: #{tpu_custom_call.1} parent=1 // pred_check
      _
    $region43: #{tpu_custom_call.1} parent=1 // pred_check_branch
      %2618 = sbr.rel (0) target = $region45
    $region44: #{tpu_custom_call.1} parent=1 // pred_region
      %s2620 = ssub.s32 1536, 1536
      %2621 = vsyncadd [#allocation3], %s2620
      %s2622 = sshll.u32 [#allocation2], 4
      %s2623 = int_to_ptr.vmem [resolvable:$true] %s2622
      %2628 = dma.vmem_to_hbm [thread:$0]  %s2623, 1536, %s10, [#allocation3], 64, 64, 4
    $region45: #{tpu_custom_call.1} parent=1 // pred_fallthru
      _
    // Predicated region
    $region46: #{tpu_custom_call.1} parent=1 // pred_check
      _
    $region47: #{tpu_custom_call.1} parent=1 // pred_check_branch
      %2630 = sbr.rel (0) target = $region49
    $region48: #{tpu_custom_call.1} parent=1 // pred_region
      _
    $region49: #{tpu_custom_call.1} parent=1 // pred_fallthru
      _
    // Predicated region
    $region50: #{tpu_custom_call.1} parent=1 // pred_check
      _
    $region51: #{tpu_custom_call.1} parent=1 // pred_check_branch
      %2632 = sbr.rel (0) target = $region53
    $region52: #{tpu_custom_call.1} parent=1 // pred_region
      %2633 = dma.done [#allocation3], 1536
    $region53: #{tpu_custom_call.1} parent=1 // pred_fallthru
      _
    // Predicated region
    $region54: #{tpu_custom_call.1} parent=1 // pred_check
      _
    $region55: #{tpu_custom_call.1} parent=1 // pred_check_branch
      %2635 = sbr.rel (0) target = $region57
    $region56: #{tpu_custom_call.1} parent=1 // pred_region
      _
    $region57: #{tpu_custom_call.1} parent=1 // pred_fallthru
      _
    %2636 = vsyncpa [#allocation3], 1

</llo_original>
